<compile_context>
chip_gen: v6e
topology: v6e:2x2x1
jax: 0.10.0
libtpu: 0.0.40
codegen_flags: <defaults>
</compile_context>

<pallas_src>
import numpy as np
import jax
import jax.numpy as jnp
from jax.experimental import pallas as pl
from jax.experimental.pallas import tpu as pltpu


# ---------------------------------------------------------------------------
# shape helpers (mirror the PyTorch module exactly)
# ---------------------------------------------------------------------------
def conv_out(h_in, padding, kernel_size, stride):
    return int((h_in + 2.0 * padding - (kernel_size - 1.0) - 1.0) / stride + 1.0)


def conv_out_shape(h_in, padding, kernel_size, stride):
    return tuple(conv_out(x, padding, kernel_size, stride) for x in h_in)


def output_padding(h_in, conv_out_, padding, kernel_size, stride):
    return h_in - (conv_out_ - 1) * stride + 2 * padding - (kernel_size - 1) - 1


def output_padding_shape(h_in, conv_out_, padding, kernel_size, stride):
    return tuple(
        output_padding(h_in[i], conv_out_[i], padding, kernel_size, stride)
        for i in range(len(h_in))
    )


def _round_up(x, m):
    return (x + m - 1) // m * m


def _cdiv(a, b):
    return -(-a // b)


# ---------------------------------------------------------------------------
# ConvTranspose2d -> dense scatter matrix (constant folding, done at init)
# ---------------------------------------------------------------------------
def _deconv_scatter_matrix(w_iokk, bias, h_in, w_in, stride, out_pad,
                           in_order, out_order):
    """Build (M, b_vec, (h_out, w_out)) such that  out_flat = in_flat @ M + b_vec
    is exactly PyTorch ConvTranspose2d(padding=0, output_padding=out_pad).

    w_iokk : (Cin, Cout, k, k) PyTorch ConvTranspose2d weight.
    in_order / out_order : 'chw' or 'hwc' flattening order of the in/out maps.
    """
    w_iokk = np.asarray(w_iokk, np.float64)
    bias = np.asarray(bias, np.float64)
    cin, cout, k, _ = w_iokk.shape
    h_out = (h_in - 1) * stride + k + out_pad[0]
    w_out = (w_in - 1) * stride + k + out_pad[1]

    def rows(ih, iw):
        if in_order == "chw":
            return np.arange(cin) * (h_in * w_in) + ih * w_in + iw
        return (ih * w_in + iw) * cin + np.arange(cin)

    def col(co, oh, ow):
        if out_order == "chw":
            return (co * h_out + oh) * w_out + ow
        return (oh * w_out + ow) * cout + co

    m = np.zeros((cin * h_in * w_in, cout * h_out * w_out), np.float64)
    b_vec = np.zeros((cout * h_out * w_out,), np.float64)
    for co in range(cout):
        for oh in range(h_out):
            for ow in range(w_out):
                c = col(co, oh, ow)
                b_vec[c] = bias[co]          # output_padding rows/cols: bias only
                for ih in range(h_in):
                    kh = oh - stride * ih
                    if kh < 0 or kh >= k:
                        continue
                    for iw in range(w_in):
                        kw = ow - stride * iw
                        if kw < 0 or kw >= k:
                            continue
                        m[rows(ih, iw), c] = w_iokk[:, co, kh, kw]
    return m, b_vec, (h_out, w_out)


# ---------------------------------------------------------------------------
# fused Pallas kernel: (Linear folded into deconv1) -> ReLU -> deconv2
# ---------------------------------------------------------------------------
def _decoder_kernel(x_ref, wf_ref, bf_ref, m2_ref, b2_ref, o_ref):
    # x_ref  : (B_t, E)   f32 embedding tile
    # wf_ref : (E, D1)    bf16  folded  W_lin @ M1  (Linear + deconv1 scatter)
    # bf_ref : (1, D1)    f32   folded  b_lin @ M1 + b1
    # m2_ref : (D1, DO)   bf16  dense scatter matrix for deconv2
    # b2_ref : (1, DO)    f32   deconv2 bias (broadcast per spatial pos)
    # o_ref  : (B_t, DO)  f32   output tile, columns already NCHW-flattened
    xb = x_ref[...].astype(jnp.bfloat16)

    # Linear + ConvTranspose2d #1 (single matmul) + ReLU
    h1 = jnp.dot(xb, wf_ref[...], preferred_element_type=jnp.float32)
    h1 = jnp.maximum(h1 + bf_ref[...], 0.0)

    # ConvTranspose2d #2 (single matmul)
    out = jnp.dot(h1.astype(jnp.bfloat16), m2_ref[...],
                  preferred_element_type=jnp.float32)
    o_ref[...] = (out + b2_ref[...]).astype(o_ref.dtype)


def _decoder_pallas_forward(x2, w_fold, b_fold, m2, b2v, *, block_b):
    bp, e = x2.shape
    d1 = w_fold.shape[1]
    do = m2.shape[1]
    grid = (bp // block_b,)
    return pl.pallas_call(
        _decoder_kernel,
        out_shape=jax.ShapeDtypeStruct((bp, do), jnp.float32),
        grid=grid,
        in_specs=[
            pl.BlockSpec((block_b, e), lambda i: (i, 0)),   # batch-tiled input
            pl.BlockSpec((e, d1), lambda i: (0, 0)),        # resident weights
            pl.BlockSpec((1, d1), lambda i: (0, 0)),        # (block index fixed =>
            pl.BlockSpec((d1, do), lambda i: (0, 0)),       #  no re-fetch per step)
            pl.BlockSpec((1, do), lambda i: (0, 0)),
        ],
        out_specs=pl.BlockSpec((block_b, do), lambda i: (i, 0)),  # lane-dense
        compiler_params=pltpu.CompilerParams(
            dimension_semantics=("parallel",),   # batch tiles are independent
            vmem_limit_bytes=32 * 1024 * 1024,   # headroom on v5e (16 MiB default)
        ),
    )(x2, w_fold, b_fold, m2, b2v)


# ---------------------------------------------------------------------------
# ObservationDecoder (Pallas) + numpy reference
# ---------------------------------------------------------------------------
class ObservationDecoderPallas:
    def __init__(self, key, depth=4, stride=2, embed_size=32, shape=(3, 16, 16),
                 batch_tile=512):
        self.depth = depth
        self.stride = stride
        self.embed_size = embed_size
        self.shape = shape
        # max batch tile: 512 keeps the per-step VMEM footprint safe on every
        # generation (incl. v5e's 16 MiB scoped default) while amortizing the
        # ~0.35 us per-grid-step pipeline overhead.
        self.batch_tile = batch_tile
        c, h, w = shape
        conv1_kernel_size = 4
        conv2_kernel_size = 4
        padding = 0
        conv1_shape = conv_out_shape((h, w), padding, conv1_kernel_size, stride)
        conv1_pad = output_padding_shape((h, w), conv1_shape, padding,
                                         conv1_kernel_size, stride)
        conv2_shape = conv_out_shape(conv1_shape, padding, conv2_kernel_size, stride)
        conv2_pad = output_padding_shape(conv1_shape, conv2_shape, padding,
                                         conv2_kernel_size, stride)
        self.conv_shape = (8 * depth, *conv2_shape)
        self.conv1_pad = conv1_pad
        self.conv2_pad = conv2_pad

        c1 = 8 * depth
        c_mid = 4 * depth
        feat = c1 * int(np.prod(conv2_shape))
        ks = jax.random.split(key, 6)
        s = 0.05
        # nn.Linear(embed_size, feat) -- stored as (in, out)
        self.w_lin = jax.random.normal(ks[0], (embed_size, feat), jnp.float32) * s
        self.b_lin = jax.random.normal(ks[1], (feat,), jnp.float32) * s
        # ConvTranspose2d weights in PyTorch layout (C_in, C_out, kH, kW)
        self.w1 = jax.random.normal(ks[2], (c1, c_mid, 4, 4), jnp.float32) * s
        self.b1 = jax.random.normal(ks[3], (c_mid,), jnp.float32) * s
        self.w2 = jax.random.normal(ks[4], (c_mid, c, 4, 4), jnp.float32) * s
        self.b2 = jax.random.normal(ks[5], (c,), jnp.float32) * s

        # ---- constant-fold each ConvTranspose2d into a dense scatter matmul.
        # Deconv1 consumes the Linear output in PyTorch channel-major ('chw')
        # order, produces 'hwc'; deconv2 consumes 'hwc', produces 'chw' so the
        # kernel output is already the flattened NCHW image.
        m1, b1v, hw1 = _deconv_scatter_matrix(
            np.asarray(self.w1), np.asarray(self.b1),
            conv2_shape[0], conv2_shape[1], stride, conv2_pad,
            in_order="chw", out_order="hwc")
        assert hw1 == conv1_shape
        m2, b2v, hw2 = _deconv_scatter_matrix(
            np.asarray(self.w2), np.asarray(self.b2),
            conv1_shape[0], conv1_shape[1], stride, conv1_pad,
            in_order="hwc", out_order="chw")
        assert hw2 == (h, w)

        # lane-align the hidden dim (e.g. 7*7*16 = 784 -> 896) with zero
        # rows/cols so every matmul K/N is a multiple of 128.
        d1 = m1.shape[1]
        d1p = _round_up(d1, 128)
        m1 = np.pad(m1, ((0, 0), (0, d1p - d1)))
        b1v = np.pad(b1v, (0, d1p - d1))
        m2 = np.pad(m2, ((0, d1p - d1), (0, 0)))

        # ---- fold the Linear into the deconv1 scatter matrix (done in f64,
        # BEFORE the bf16 cast):  x@W_lin@M1 + b_lin@M1 + b1  ==  x@W_fold + b_fold
        w_lin64 = np.asarray(self.w_lin, np.float64)
        b_lin64 = np.asarray(self.b_lin, np.float64)
        w_fold = w_lin64 @ m1                       # (embed_size, d1p)
        b_fold = b_lin64 @ m1 + b1v                 # (d1p,)

        # bf16 weights (single-pass MXU on all TPU gens), f32 biases.
        self.w_fold = jnp.asarray(w_fold, jnp.bfloat16)
        self.b_fold = jnp.asarray(b_fold, jnp.float32).reshape(1, d1p)
        self.m2 = jnp.asarray(m2, jnp.bfloat16)
        self.b2_vec = jnp.asarray(b2v, jnp.float32).reshape(1, -1)

    # ---- batch tile selection:
    #   * multiple of 8 (f32 sublane tiling)
    #   * >= 2 grid tiles whenever the batch allows it, so the "parallel" grid
    #     axis can shard across both v7x TensorCores
    #   * minimal padding waste (b=136 -> tile 72, padded 144; not 256)
    def _pick_batch_tile(self, b):
        b8 = _round_up(b, 8)
        if b8 <= 16:                       # tiny batch: one tile, no split
            return b8
        n_tiles = max(2, _cdiv(b8, self.batch_tile))
        return _round_up(_cdiv(b8, n_tiles), 8)

    def __call__(self, x):
        batch_shape = x.shape[:-1]
        e = x.shape[-1]
        b = int(np.prod(batch_shape))
        x2 = jnp.asarray(x, jnp.float32).reshape(b, e)

        bt = self._pick_batch_tile(b)
        bp = _round_up(b, bt)
        if bp != b:
            x2 = jnp.pad(x2, ((0, bp - b), (0, 0)))

        out = _decoder_pallas_forward(
            x2, self.w_fold, self.b_fold, self.m2, self.b2_vec, block_b=bt)

        mean = out[:b].reshape(*batch_shape, *self.shape)
        # TODO(synk): torch.distributions.Normal(mean, 1) has no Pallas
        # equivalent; the kernel returns the distribution mean (scale is 1).
        return mean

    # ---- pure numpy reference (PyTorch NCHW semantics) ----
    def reference(self, x):
        x = np.asarray(x, np.float64)
        batch_shape = x.shape[:-1]
        e = x.shape[-1]
        b = int(np.prod(batch_shape))
        c1, h1, w1 = self.conv_shape
        lin = x.reshape(b, e) @ np.asarray(self.w_lin, np.float64) + np.asarray(
            self.b_lin, np.float64
        )
        h = lin.reshape(b, c1, h1, w1)
        h = _conv_transpose2d_ref(
            h, np.asarray(self.w1, np.float64), np.asarray(self.b1, np.float64),
            self.stride, self.conv2_pad,
        )
        h = np.maximum(h, 0.0)
        y = _conv_transpose2d_ref(
            h, np.asarray(self.w2, np.float64), np.asarray(self.b2, np.float64),
            self.stride, self.conv1_pad,
        )
        return y.reshape(*batch_shape, *self.shape)


def _conv_transpose2d_ref(x, w, b, stride, out_pad):
    # x: (N, Cin, H, W); w: (Cin, Cout, k, k); PyTorch ConvTranspose2d, padding=0.
    n, cin, h, w_sp = x.shape
    cout, k = w.shape[1], w.shape[2]
    hout = (h - 1) * stride + k + out_pad[0]
    wout = (w_sp - 1) * stride + k + out_pad[1]
    out = np.zeros((n, cout, hout, wout), np.float64) + b[None, :, None, None]
    for kh in range(k):
        for kw in range(k):
            contrib = np.einsum("nchw,cd->ndhw", x, w[:, :, kh, kw])
            out[
                :,
                :,
                kh:kh + (h - 1) * stride + 1:stride,
                kw:kw + (w_sp - 1) * stride + 1:stride,
            ] += contrib
    return out


# ---------------------------------------------------------------------------
if __name__ == "__main__":
    key = jax.random.PRNGKey(0)
    depth = 4
    embed_size = 32
    obs_shape = (3, 16, 16)
    batch_shape = (2, 4)

    decoder = ObservationDecoderPallas(
        key, depth=depth, stride=2, embed_size=embed_size, shape=obs_shape
    )

    x = jax.random.normal(
        jax.random.fold_in(key, 99), (*batch_shape, embed_size), jnp.float32
    )

    mean = decoder(x)
    mean = jax.block_until_ready(mean)

    assert mean.shape == (*batch_shape, *obs_shape), mean.shape

    ref = decoder.reference(np.asarray(x))
    np.testing.assert_allclose(np.asarray(mean), ref, rtol=2e-2, atol=2e-2)

    print("KERNEL_OK")
</pallas_src>

<mosaic_0001>
module attributes {stable_mosaic.version = 11 : i64} {
  func.func @_decoder_kernel(%arg0: i32, %arg1: memref<8x32xf32, #tpu.memory_space<vmem>>, %arg2: memref<32x896xbf16, #tpu.memory_space<vmem>>, %arg3: memref<1x896xf32, #tpu.memory_space<vmem>>, %arg4: memref<896x768xbf16, #tpu.memory_space<vmem>>, %arg5: memref<1x768xf32, #tpu.memory_space<vmem>>, %arg6: memref<8x768xf32, #tpu.memory_space<vmem>>) attributes {dimension_semantics = [#tpu.dimension_semantics<parallel>], iteration_bounds = array<i64: 1>, scalar_prefetch = 0 : i64, scratch_operands = 0 : i64, tpu.core_type = #tpu.core_type<tc>, window_params = [{transform_indices = @transform_0, window_bounds = array<i64: 8, 32>}, {pipeline_mode = #tpu.pipeline_mode<synchronous>, transform_indices = @transform_1, window_bounds = array<i64: 32, 896>}, {pipeline_mode = #tpu.pipeline_mode<synchronous>, transform_indices = @transform_2, window_bounds = array<i64: 1, 896>}, {pipeline_mode = #tpu.pipeline_mode<synchronous>, transform_indices = @transform_3, window_bounds = array<i64: 896, 768>}, {pipeline_mode = #tpu.pipeline_mode<synchronous>, transform_indices = @transform_4, window_bounds = array<i64: 1, 768>}, {transform_indices = @transform_5, window_bounds = array<i64: 8, 768>}]} {
    %c0 = arith.constant 0 : index
    %c0_0 = arith.constant 0 : index
    %0 = vector.load %arg1[%c0, %c0_0] : memref<8x32xf32, #tpu.memory_space<vmem>>, vector<8x32xf32>
    %1 = arith.truncf %0 : vector<8x32xf32> to vector<8x32xbf16>
    %c0_1 = arith.constant 0 : index
    %c0_2 = arith.constant 0 : index
    %2 = vector.load %arg2[%c0_1, %c0_2] : memref<32x896xbf16, #tpu.memory_space<vmem>>, vector<32x896xbf16>
    %cst = arith.constant dense<0.000000e+00> : vector<8x896xf32>
    %3 = tpu.matmul %1, %2, %cst {dimension_numbers = #tpu.dot_dimension_numbers<[1], [0], [0], [1], [0, 0, 1, 1], [], []>} : vector<8x32xbf16>, vector<32x896xbf16>, vector<8x896xf32> -> vector<8x896xf32>
    %c0_3 = arith.constant 0 : index
    %c0_4 = arith.constant 0 : index
    %4 = vector.load %arg3[%c0_3, %c0_4] : memref<1x896xf32, #tpu.memory_space<vmem>>, vector<1x896xf32>
    %5 = vector.broadcast %4 : vector<1x896xf32> to vector<8x896xf32>
    %6 = arith.addf %3, %5 : vector<8x896xf32>
    %cst_5 = arith.constant 0.000000e+00 : f32
    %7 = vector.broadcast %cst_5 : f32 to vector<8x896xf32>
    %8 = arith.maximumf %6, %7 : vector<8x896xf32>
    %9 = arith.truncf %8 : vector<8x896xf32> to vector<8x896xbf16>
    %c0_6 = arith.constant 0 : index
    %c0_7 = arith.constant 0 : index
    %10 = vector.load %arg4[%c0_6, %c0_7] : memref<896x768xbf16, #tpu.memory_space<vmem>>, vector<896x768xbf16>
    %cst_8 = arith.constant dense<0.000000e+00> : vector<8x768xf32>
    %11 = tpu.matmul %9, %10, %cst_8 {dimension_numbers = #tpu.dot_dimension_numbers<[1], [0], [0], [1], [0, 0, 1, 1], [], []>} : vector<8x896xbf16>, vector<896x768xbf16>, vector<8x768xf32> -> vector<8x768xf32>
    %c0_9 = arith.constant 0 : index
    %c0_10 = arith.constant 0 : index
    %12 = vector.load %arg5[%c0_9, %c0_10] : memref<1x768xf32, #tpu.memory_space<vmem>>, vector<1x768xf32>
    %13 = vector.broadcast %12 : vector<1x768xf32> to vector<8x768xf32>
    %14 = arith.addf %11, %13 : vector<8x768xf32>
    %c0_11 = arith.constant 0 : index
    %c0_12 = arith.constant 0 : index
    %15 = vector.load %arg6[%c0_11, %c0_12] : memref<8x768xf32, #tpu.memory_space<vmem>>, vector<8x768xf32>
    tpu.vector_store %arg6[%c0_11, %c0_12], %14 {strides = array<i32>} : memref<8x768xf32, #tpu.memory_space<vmem>>, vector<8x768xf32>,
    return
  }
  func.func @transform_0(%arg0: i32) -> (i32, i32) {
    %c0_i32 = arith.constant 0 : i32
    %c0_i32_0 = arith.constant 0 : i32
    return %arg0, %c0_i32 : i32, i32
  }
  func.func @transform_1(%arg0: i32) -> (i32, i32) {
    %c0_i32 = arith.constant 0 : i32
    %c0_i32_0 = arith.constant 0 : i32
    %c0_i32_1 = arith.constant 0 : i32
    return %c0_i32, %c0_i32_0 : i32, i32
  }
  func.func @transform_2(%arg0: i32) -> (i32, i32) {
    %c0_i32 = arith.constant 0 : i32
    %c0_i32_0 = arith.constant 0 : i32
    %c0_i32_1 = arith.constant 0 : i32
    return %c0_i32, %c0_i32_0 : i32, i32
  }
  func.func @transform_3(%arg0: i32) -> (i32, i32) {
    %c0_i32 = arith.constant 0 : i32
    %c0_i32_0 = arith.constant 0 : i32
    %c0_i32_1 = arith.constant 0 : i32
    return %c0_i32, %c0_i32_0 : i32, i32
  }
  func.func @transform_4(%arg0: i32) -> (i32, i32) {
    %c0_i32 = arith.constant 0 : i32
    %c0_i32_0 = arith.constant 0 : i32
    %c0_i32_1 = arith.constant 0 : i32
    return %c0_i32, %c0_i32_0 : i32, i32
  }
  func.func @transform_5(%arg0: i32) -> (i32, i32) {
    %c0_i32 = arith.constant 0 : i32
    %c0_i32_0 = arith.constant 0 : i32
    return %arg0, %c0_i32 : i32, i32
  }
}

</mosaic_0001>

<llo_original>
// kernel: tpu_custom_call.1
$region0: #{tpu_custom_call.1}
  #allocation0 [shape = 'u32[]', space=smem, size = 0x4, offset = 0x4, fixed_abs, tag = 'smem constant byte address 0x4 - core index']
  #allocation1 [shape = 'u32[144,128]{1,0:T(1,128)}', space=vmem, size = 0x12000, scoped, tag = 'internal scratch']
  %s0 = inlined_call_operand.hbm [shape: f32[8,32], index: 0, kind: input, shape index: {}]
  %s1 = inlined_call_operand.hbm [shape: bf16[32,896], index: 1, kind: input, shape index: {}]
  %s2 = inlined_call_operand.hbm [shape: f32[1,896], index: 2, kind: input, shape index: {}]
  %s3 = inlined_call_operand.hbm [shape: bf16[896,768], index: 3, kind: input, shape index: {}]
  %s4 = inlined_call_operand.hbm [shape: f32[1,768], index: 4, kind: input, shape index: {}]
  %s5 = inlined_call_operand.hbm [shape: f32[8,768], index: 5, kind: output, shape index: {}]
  %s6 = sld [smem:[#allocation0]]
  $region50: #{tpu_custom_call.1} parent=0
    _
  %s8 = ssub.s32 1, %s6
  %s9 = scalar_select 0, %s8, %s6
  $region1: #{tpu_custom_call.1} parent=0
    #allocation2 [shape = 'u8[4096]{0}', space=vmem, size = 0x1000, scoped, tag = 'input window, operand 0, single buffered']
    #allocation3 [shape = 's32[1]{0}', space=sflag, size = 0x4, scoped, tag = 'scoped memory for tpu_custom_call.1']
    #allocation4 [shape = 's32[1]{0}', space=sflag, size = 0x4, scoped, tag = 'scoped memory for tpu_custom_call.1']
    #allocation5 [shape = 'u8[57344]{0}', space=vmem, size = 0xe000, scoped, tag = 'input window, operand 1, single buffered']
    #allocation6 [shape = 's32[1]{0}', space=sflag, size = 0x4, scoped, tag = 'scoped memory for tpu_custom_call.1']
    #allocation7 [shape = 'u8[3584]{0}', space=vmem, size = 0x1000, scoped, tag = 'input window, operand 2, single buffered']
    #allocation8 [shape = 'u8[1376256]{0}', space=vmem, size = 0x150000, scoped, tag = 'input window, operand 3, single buffered']
    #allocation9 [shape = 's32[1]{0}', space=sflag, size = 0x4, scoped, tag = 'scoped memory for tpu_custom_call.1']
    #allocation10 [shape = 'u8[3072]{0}', space=vmem, size = 0xc00, scoped, tag = 'input window, operand 4, single buffered']
    #allocation11 [shape = 'u8[24576]{0}', space=vmem, size = 0x6000, scoped, tag = 'output window, operand 0, single buffered']
    %10 = vsyncpa [#allocation3], 0
    %11 = vsyncpa [#allocation6], 0
    %12 = vsyncpa [#allocation9], 0
    %13 = vsyncpa [#allocation4], 0
    // Predicated region
    $region2: #{tpu_custom_call.1} parent=1 // pred_check
      _
    $region3: #{tpu_custom_call.1} parent=1 // pred_check_branch
      %15 = sbr.rel (0) target = $region5
    $region4: #{tpu_custom_call.1} parent=1 // pred_region
      %s17 = ssub.s32 128, 128
      %18 = vsyncadd [#allocation3], %s17
      %s20 = sshll.u32 [#allocation2], 4
      %s21 = int_to_ptr.vmem [resolvable:$true] %s20
      %23 = dma.hbm_to_vmem [thread:$0]  %s0, 128, %s21, [#allocation3]
    $region5: #{tpu_custom_call.1} parent=1 // pred_fallthru
      _
    // Predicated region
    $region6: #{tpu_custom_call.1} parent=1 // pred_check
      _
    $region7: #{tpu_custom_call.1} parent=1 // pred_check_branch
      %25 = sbr.rel (0) target = $region9
    $region8: #{tpu_custom_call.1} parent=1 // pred_region
      %s27 = ssub.s32 1792, 1792
      %28 = vsyncadd [#allocation6], %s27
      %s29 = sshll.u32 [#allocation5], 4
      %s30 = int_to_ptr.vmem [resolvable:$true] %s29
      %35 = dma.hbm_to_vmem [thread:$0]  %s1, 1792, %s30, [#allocation6], 448, 448, 28
    $region9: #{tpu_custom_call.1} parent=1 // pred_fallthru
      _
    // Predicated region
    $region10: #{tpu_custom_call.1} parent=1 // pred_check
      _
    $region11: #{tpu_custom_call.1} parent=1 // pred_check_branch
      %37 = sbr.rel (0) target = $region13
    $region12: #{tpu_custom_call.1} parent=1 // pred_region
      %s39 = ssub.s32 112, 112
      %40 = vsyncadd [#allocation6], %s39
      %s42 = sshll.u32 [#allocation7], 4
      %s43 = int_to_ptr.vmem [resolvable:$true] %s42
      %45 = dma.hbm_to_vmem [thread:$0]  %s2, 112, %s43, [#allocation6]
    $region13: #{tpu_custom_call.1} parent=1 // pred_fallthru
      _
    // Predicated region
    $region14: #{tpu_custom_call.1} parent=1 // pred_check
      _
    $region15: #{tpu_custom_call.1} parent=1 // pred_check_branch
      %47 = sbr.rel (0) target = $region17
    $region16: #{tpu_custom_call.1} parent=1 // pred_region
      %s49 = ssub.s32 43008, 43008
      %50 = vsyncadd [#allocation9], %s49
      %s51 = sshll.u32 [#allocation8], 4
      %s52 = int_to_ptr.vmem [resolvable:$true] %s51
      %57 = dma.hbm_to_vmem [thread:$0]  %s3, 43008, %s52, [#allocation9], 384, 384, 24
    $region17: #{tpu_custom_call.1} parent=1 // pred_fallthru
      _
    // Predicated region
    $region18: #{tpu_custom_call.1} parent=1 // pred_check
      _
    $region19: #{tpu_custom_call.1} parent=1 // pred_check_branch
      %59 = sbr.rel (0) target = $region21
    $region20: #{tpu_custom_call.1} parent=1 // pred_region
      %s61 = ssub.s32 96, 96
      %62 = vsyncadd [#allocation9], %s61
      %s64 = sshll.u32 [#allocation10], 4
      %s65 = int_to_ptr.vmem [resolvable:$true] %s64
      %67 = dma.hbm_to_vmem [thread:$0]  %s4, 96, %s65, [#allocation9]
    $region21: #{tpu_custom_call.1} parent=1 // pred_fallthru
      _
    // Predicated region
    $region22: #{tpu_custom_call.1} parent=1 // pred_check
      _
    $region23: #{tpu_custom_call.1} parent=1 // pred_check_branch
      %69 = sbr.rel (0) target = $region25
    $region24: #{tpu_custom_call.1} parent=1 // pred_region
      %70 = dma.done [#allocation3], 128
    $region25: #{tpu_custom_call.1} parent=1 // pred_fallthru
      _
    // Predicated region
    $region26: #{tpu_custom_call.1} parent=1 // pred_check
      _
    $region27: #{tpu_custom_call.1} parent=1 // pred_check_branch
      %72 = sbr.rel (0) target = $region29
    $region28: #{tpu_custom_call.1} parent=1 // pred_region
      %73 = dma.done [#allocation6], 1792
    $region29: #{tpu_custom_call.1} parent=1 // pred_fallthru
      _
    // Predicated region
    $region30: #{tpu_custom_call.1} parent=1 // pred_check
      _
    $region31: #{tpu_custom_call.1} parent=1 // pred_check_branch
      %75 = sbr.rel (0) target = $region33
    $region32: #{tpu_custom_call.1} parent=1 // pred_region
      %76 = dma.done [#allocation6], 112
    $region33: #{tpu_custom_call.1} parent=1 // pred_fallthru
      _
    // Predicated region
    $region34: #{tpu_custom_call.1} parent=1 // pred_check
      _
    $region35: #{tpu_custom_call.1} parent=1 // pred_check_branch
      %78 = sbr.rel (0) target = $region37
    $region36: #{tpu_custom_call.1} parent=1 // pred_region
      %79 = dma.done [#allocation9], 43008
    $region37: #{tpu_custom_call.1} parent=1 // pred_fallthru
      _
    // Predicated region
    $region38: #{tpu_custom_call.1} parent=1 // pred_check
      _
    $region39: #{tpu_custom_call.1} parent=1 // pred_check_branch
      %81 = sbr.rel (0) target = $region41
    $region40: #{tpu_custom_call.1} parent=1 // pred_region
      %82 = dma.done [#allocation9], 96
    $region41: #{tpu_custom_call.1} parent=1 // pred_fallthru
      _
    %v84 = vld [vmem:[#allocation2] sm:$0xff]
    %v85 = vpack.c.bf16 %v84, %v84
    %v86 = vld [vmem:[#allocation5] sm:$0xff]
    %v87 = vld [vmem:[#allocation5 + $0x8] sm:$0xff]
    %v88 = vld [vmem:[#allocation5 + $0x10] sm:$0xff]
    %v89 = vld [vmem:[#allocation5 + $0x18] sm:$0xf]
    %v90 = vld [vmem:[#allocation5 + $0x1c] sm:$0xff]
    %v91 = vld [vmem:[#allocation5 + $0x24] sm:$0xff]
    %v92 = vld [vmem:[#allocation5 + $0x2c] sm:$0xff]
    %v93 = vld [vmem:[#allocation5 + $0x34] sm:$0xf]
    %v94 = vld [vmem:[#allocation5 + $0x38] sm:$0xff]
    %v95 = vld [vmem:[#allocation5 + $0x40] sm:$0xff]
    %v96 = vld [vmem:[#allocation5 + $0x48] sm:$0xff]
    %v97 = vld [vmem:[#allocation5 + $0x50] sm:$0xf]
    %v98 = vld [vmem:[#allocation5 + $0x54] sm:$0xff]
    %v99 = vld [vmem:[#allocation5 + $0x5c] sm:$0xff]
    %v100 = vld [vmem:[#allocation5 + $0x64] sm:$0xff]
    %v101 = vld [vmem:[#allocation5 + $0x6c] sm:$0xf]
    %v102 = vld [vmem:[#allocation7] sm:$0xff]
    %v104 = vlaneseq
    %v105 = vshrl.u32 %v104, 7
    %v106 = vsub.s32 0, %v105
    %v107 = vrot.slane %v102, %v106
    %v108 = vlaneseq
    %v109 = vshrl.u32 %v108, 7
    %v110 = vsub.s32 1, %v109
    %v111 = vrot.slane %v102, %v110
    %v112 = vlaneseq
    %v113 = vshrl.u32 %v112, 7
    %v114 = vsub.s32 2, %v113
    %v115 = vrot.slane %v102, %v114
    %v116 = vlaneseq
    %v117 = vshrl.u32 %v116, 7
    %v118 = vsub.s32 3, %v117
    %v119 = vrot.slane %v102, %v118
    %v120 = vlaneseq
    %v121 = vshrl.u32 %v120, 7
    %v122 = vsub.s32 4, %v121
    %v123 = vrot.slane %v102, %v122
    %v124 = vlaneseq
    %v125 = vshrl.u32 %v124, 7
    %v126 = vsub.s32 5, %v125
    %v127 = vrot.slane %v102, %v126
    %v128 = vlaneseq
    %v129 = vshrl.u32 %v128, 7
    %v130 = vsub.s32 6, %v129
    %v131 = vrot.slane %v102, %v130
    %v155 = vunpack.c.l.b16 %v86
    %v156 = vunpack.c.h.b16 %v86
    %v157 = vunpack.c.l.b16 %v87
    %v158 = vunpack.c.h.b16 %v87
    %v159 = vunpack.c.l.b16 %v88
    %v160 = vunpack.c.h.b16 %v88
    %v161 = vunpack.c.l.b16 %v89
    %v162 = vunpack.c.l.b16 %v90
    %v163 = vunpack.c.h.b16 %v90
    %v164 = vunpack.c.l.b16 %v91
    %v165 = vunpack.c.h.b16 %v91
    %v166 = vunpack.c.l.b16 %v92
    %v167 = vunpack.c.h.b16 %v92
    %v168 = vunpack.c.l.b16 %v93
    %v169 = vunpack.c.l.b16 %v94
    %v170 = vunpack.c.h.b16 %v94
    %v171 = vunpack.c.l.b16 %v95
    %v172 = vunpack.c.h.b16 %v95
    %v173 = vunpack.c.l.b16 %v96
    %v174 = vunpack.c.h.b16 %v96
    %v175 = vunpack.c.l.b16 %v97
    %v176 = vunpack.c.l.b16 %v98
    %v177 = vunpack.c.h.b16 %v98
    %v178 = vunpack.c.l.b16 %v99
    %v179 = vunpack.c.h.b16 %v99
    %v180 = vunpack.c.l.b16 %v100
    %v181 = vunpack.c.h.b16 %v100
    %v182 = vunpack.c.l.b16 %v101
    %v183 = vpack.c.b16 %v162, %v155
    %v184 = vpack.c.b16 %v163, %v156
    %v185 = vpack.c.b16 %v164, %v157
    %v186 = vpack.c.b16 %v165, %v158
    %v187 = vpack.c.b16 %v166, %v159
    %v188 = vpack.c.b16 %v167, %v160
    %v189 = vpack.c.b16 %v168, %v161
    %v190 = vpack.c.b16 %v176, %v169
    %v191 = vpack.c.b16 %v177, %v170
    %v192 = vpack.c.b16 %v178, %v171
    %v193 = vpack.c.b16 %v179, %v172
    %v194 = vpack.c.b16 %v180, %v173
    %v195 = vpack.c.b16 %v181, %v174
    %v196 = vpack.c.b16 %v182, %v175
    %vm211 = vcmask 261120
    %v213 = vsel %vm211, %v85, 0
    %215 = vmatprep.subr.bf16.mxu0 0
    %216 = vmatpush1.bf16.msra.mxu0 0
    %217 = vmatprep.subr.bf16.mxu0 0
    %218 = vmatpush1.bf16.msra.mxu0 0
    %219 = vmatprep.subr.bf16.mxu0 0
    %220 = vmatpush1.bf16.msra.mxu0 0
    %221 = vmatprep.subr.bf16.mxu0 0
    %222 = vmatpush1.bf16.msra.mxu0 0
    %223 = vmatprep.subr.bf16.mxu0 0
    %224 = vmatpush1.bf16.msra.mxu0 0
    %225 = vmatprep.subr.bf16.mxu0 0
    %226 = vmatpush1.bf16.msra.mxu0 0
    %227 = vmatprep.subr.bf16.mxu0 %v191
    %228 = vmatpush1.bf16.msra.mxu0 %v190
    %229 = vmatprep.subr.bf16.mxu0 %v184
    %230 = vmatpush1.bf16.msra.mxu0 %v183
    %231 = vmatprep.subr.bf16.mxu0 0
    %232 = vmatpush2.bf16.msra.mxu0 0
    %233 = vmatprep.subr.bf16.mxu0 0
    %234 = vmatpush2.bf16.msra.mxu0 0
    %235 = vmatprep.subr.bf16.mxu0 0
    %236 = vmatpush2.bf16.msra.mxu0 0
    %237 = vmatprep.subr.bf16.mxu0 0
    %238 = vmatpush2.bf16.msra.mxu0 0
    %239 = vmatprep.subr.bf16.mxu0 0
    %240 = vmatpush2.bf16.msra.mxu0 0
    %241 = vmatprep.subr.bf16.mxu0 0
    %242 = vmatpush2.bf16.msra.mxu0 0
    %243 = vmatprep.subr.bf16.mxu0 0
    %244 = vmatpush2.bf16.msra.mxu0 0
    %245 = vmatprep.subr.bf16.mxu0 0
    %246 = vmatpush2.bf16.msra.mxu0 0
    %247 = vmatprep.mubr.bf16.mxu0 0
    %248 = vmatmul.mubr.bf16.gmra.mxu0 %v213
    %v249 = vpop.f32.mrf.mxu0
    %v250 = vadd.f32 %v107, %v249
    %v251 = vpop.f32.mrf.mxu0
    %v252 = vadd.f32 %v111, %v251
    %v253 = vpop.f32.mrf.mxu0
    %v254 = vpop.f32.mrf.mxu0
    %255 = vdwg.mxu0
    %256 = vmatprep.subr.bf16.mxu0 0
    %257 = vmatpush1.bf16.msra.mxu0 0
    %258 = vmatprep.subr.bf16.mxu0 0
    %259 = vmatpush1.bf16.msra.mxu0 0
    %260 = vmatprep.subr.bf16.mxu0 0
    %261 = vmatpush1.bf16.msra.mxu0 0
    %262 = vmatprep.subr.bf16.mxu0 0
    %263 = vmatpush1.bf16.msra.mxu0 0
    %264 = vmatprep.subr.bf16.mxu0 0
    %265 = vmatpush1.bf16.msra.mxu0 0
    %266 = vmatprep.subr.bf16.mxu0 0
    %267 = vmatpush1.bf16.msra.mxu0 0
    %268 = vmatprep.subr.bf16.mxu0 %v193
    %269 = vmatpush1.bf16.msra.mxu0 %v192
    %270 = vmatprep.subr.bf16.mxu0 %v186
    %271 = vmatpush1.bf16.msra.mxu0 %v185
    %272 = vmatprep.subr.bf16.mxu0 0
    %273 = vmatpush2.bf16.msra.mxu0 0
    %274 = vmatprep.subr.bf16.mxu0 0
    %275 = vmatpush2.bf16.msra.mxu0 0
    %276 = vmatprep.subr.bf16.mxu0 0
    %277 = vmatpush2.bf16.msra.mxu0 0
    %278 = vmatprep.subr.bf16.mxu0 0
    %279 = vmatpush2.bf16.msra.mxu0 0
    %280 = vmatprep.subr.bf16.mxu0 0
    %281 = vmatpush2.bf16.msra.mxu0 0
    %282 = vmatprep.subr.bf16.mxu0 0
    %283 = vmatpush2.bf16.msra.mxu0 0
    %284 = vmatprep.subr.bf16.mxu0 0
    %285 = vmatpush2.bf16.msra.mxu0 0
    %286 = vmatprep.subr.bf16.mxu0 0
    %287 = vmatpush2.bf16.msra.mxu0 0
    %288 = vmatprep.mubr.bf16.mxu0 0
    %289 = vmatmul.mubr.bf16.gmra.mxu0 %v213
    %v290 = vpop.f32.mrf.mxu0
    %v291 = vadd.f32 %v115, %v290
    %v292 = vpop.f32.mrf.mxu0
    %v293 = vadd.f32 %v119, %v292
    %v294 = vpop.f32.mrf.mxu0
    %v295 = vpop.f32.mrf.mxu0
    %296 = vdwg.mxu0
    %297 = vmatprep.subr.bf16.mxu0 0
    %298 = vmatpush1.bf16.msra.mxu0 0
    %299 = vmatprep.subr.bf16.mxu0 0
    %300 = vmatpush1.bf16.msra.mxu0 0
    %301 = vmatprep.subr.bf16.mxu0 0
    %302 = vmatpush1.bf16.msra.mxu0 0
    %303 = vmatprep.subr.bf16.mxu0 0
    %304 = vmatpush1.bf16.msra.mxu0 0
    %305 = vmatprep.subr.bf16.mxu0 0
    %306 = vmatpush1.bf16.msra.mxu0 0
    %307 = vmatprep.subr.bf16.mxu0 0
    %308 = vmatpush1.bf16.msra.mxu0 0
    %309 = vmatprep.subr.bf16.mxu0 %v195
    %310 = vmatpush1.bf16.msra.mxu0 %v194
    %311 = vmatprep.subr.bf16.mxu0 %v188
    %312 = vmatpush1.bf16.msra.mxu0 %v187
    %313 = vmatprep.subr.bf16.mxu0 0
    %314 = vmatpush2.bf16.msra.mxu0 0
    %315 = vmatprep.subr.bf16.mxu0 0
    %316 = vmatpush2.bf16.msra.mxu0 0
    %317 = vmatprep.subr.bf16.mxu0 0
    %318 = vmatpush2.bf16.msra.mxu0 0
    %319 = vmatprep.subr.bf16.mxu0 0
    %320 = vmatpush2.bf16.msra.mxu0 0
    %321 = vmatprep.subr.bf16.mxu0 0
    %322 = vmatpush2.bf16.msra.mxu0 0
    %323 = vmatprep.subr.bf16.mxu0 0
    %324 = vmatpush2.bf16.msra.mxu0 0
    %325 = vmatprep.subr.bf16.mxu0 0
    %326 = vmatpush2.bf16.msra.mxu0 0
    %327 = vmatprep.subr.bf16.mxu0 0
    %328 = vmatpush2.bf16.msra.mxu0 0
    %329 = vmatprep.mubr.bf16.mxu0 0
    %330 = vmatmul.mubr.bf16.gmra.mxu0 %v213
    %v331 = vpop.f32.mrf.mxu0
    %v332 = vadd.f32 %v123, %v331
    %v333 = vpop.f32.mrf.mxu0
    %v334 = vadd.f32 %v127, %v333
    %v335 = vpop.f32.mrf.mxu0
    %v336 = vpop.f32.mrf.mxu0
    %337 = vdwg.mxu0
    %338 = vmatprep.subr.bf16.mxu0 0
    %339 = vmatpush1.bf16.msra.mxu0 0
    %340 = vmatprep.subr.bf16.mxu0 0
    %341 = vmatpush1.bf16.msra.mxu0 0
    %342 = vmatprep.subr.bf16.mxu0 0
    %343 = vmatpush1.bf16.msra.mxu0 0
    %344 = vmatprep.subr.bf16.mxu0 0
    %345 = vmatpush1.bf16.msra.mxu0 0
    %346 = vmatprep.subr.bf16.mxu0 0
    %347 = vmatpush1.bf16.msra.mxu0 0
    %348 = vmatprep.subr.bf16.mxu0 0
    %349 = vmatpush1.bf16.msra.mxu0 0
    %350 = vmatprep.subr.bf16.mxu0 0
    %351 = vmatpush1.bf16.msra.mxu0 %v196
    %352 = vmatprep.subr.bf16.mxu0 0
    %353 = vmatpush1.bf16.msra.mxu0 %v189
    %354 = vmatprep.subr.bf16.mxu0 0
    %355 = vmatpush2.bf16.msra.mxu0 0
    %356 = vmatprep.subr.bf16.mxu0 0
    %357 = vmatpush2.bf16.msra.mxu0 0
    %358 = vmatprep.subr.bf16.mxu0 0
    %359 = vmatpush2.bf16.msra.mxu0 0
    %360 = vmatprep.subr.bf16.mxu0 0
    %361 = vmatpush2.bf16.msra.mxu0 0
    %362 = vmatprep.subr.bf16.mxu0 0
    %363 = vmatpush2.bf16.msra.mxu0 0
    %364 = vmatprep.subr.bf16.mxu0 0
    %365 = vmatpush2.bf16.msra.mxu0 0
    %366 = vmatprep.subr.bf16.mxu0 0
    %367 = vmatpush2.bf16.msra.mxu0 0
    %368 = vmatprep.subr.bf16.mxu0 0
    %369 = vmatpush2.bf16.msra.mxu0 0
    %370 = vmatprep.mubr.bf16.mxu0 0
    %371 = vmatmul.mubr.bf16.gmra.mxu0 %v213
    %v372 = vpop.f32.mrf.mxu0
    %v373 = vadd.f32 %v131, %v372
    %v374 = vpop.f32.mrf.mxu0
    %v375 = vpop.f32.mrf.mxu0
    %v376 = vpop.f32.mrf.mxu0
    %377 = vdwg.mxu0
    %v378 = vmax.f32 %v250, 0.0
    %v379 = vmax.f32 %v252, 0.0
    %v380 = vmax.f32 %v291, 0.0
    %v381 = vmax.f32 %v293, 0.0
    %v382 = vmax.f32 %v332, 0.0
    %v383 = vmax.f32 %v334, 0.0
    %v384 = vmax.f32 %v373, 0.0
    %v385 = vpack.c.bf16 %v378, %v378
    %v386 = vpack.c.bf16 %v379, %v379
    %v387 = vpack.c.bf16 %v380, %v380
    %v388 = vpack.c.bf16 %v381, %v381
    %v389 = vpack.c.bf16 %v382, %v382
    %v390 = vpack.c.bf16 %v383, %v383
    %v391 = vpack.c.bf16 %v384, %v384
    %v392 = vld [vmem:[#allocation8] sm:$0xff]
    %v393 = vld [vmem:[#allocation8 + $0x8] sm:$0xff]
    %v394 = vld [vmem:[#allocation8 + $0x10] sm:$0xff]
    %v395 = vld [vmem:[#allocation8 + $0x18] sm:$0xff]
    %v396 = vld [vmem:[#allocation8 + $0x20] sm:$0xff]
    %v397 = vld [vmem:[#allocation8 + $0x28] sm:$0xff]
    %v398 = vld [vmem:[#allocation8 + $0x30] sm:$0xff]
    %v399 = vld [vmem:[#allocation8 + $0x38] sm:$0xff]
    %v400 = vld [vmem:[#allocation8 + $0x40] sm:$0xff]
    %v401 = vld [vmem:[#allocation8 + $0x48] sm:$0xff]
    %v402 = vld [vmem:[#allocation8 + $0x50] sm:$0xff]
    %v403 = vld [vmem:[#allocation8 + $0x58] sm:$0xff]
    %v404 = vld [vmem:[#allocation8 + $0x60] sm:$0xff]
    %v405 = vld [vmem:[#allocation8 + $0x68] sm:$0xff]
    %v406 = vld [vmem:[#allocation8 + $0x70] sm:$0xff]
    %v407 = vld [vmem:[#allocation8 + $0x78] sm:$0xff]
    %v408 = vld [vmem:[#allocation8 + $0x80] sm:$0xff]
    %v409 = vld [vmem:[#allocation8 + $0x88] sm:$0xff]
    %v410 = vld [vmem:[#allocation8 + $0x90] sm:$0xff]
    %v411 = vld [vmem:[#allocation8 + $0x98] sm:$0xff]
    %v412 = vld [vmem:[#allocation8 + $0xa0] sm:$0xff]
    %v413 = vld [vmem:[#allocation8 + $0xa8] sm:$0xff]
    %v414 = vld [vmem:[#allocation8 + $0xb0] sm:$0xff]
    %v415 = vld [vmem:[#allocation8 + $0xb8] sm:$0xff]
    %v416 = vld [vmem:[#allocation8 + $0xc0] sm:$0xff]
    %v417 = vld [vmem:[#allocation8 + $0xc8] sm:$0xff]
    %v418 = vld [vmem:[#allocation8 + $0xd0] sm:$0xff]
    %v419 = vld [vmem:[#allocation8 + $0xd8] sm:$0xff]
    %v420 = vld [vmem:[#allocation8 + $0xe0] sm:$0xff]
    %v421 = vld [vmem:[#allocation8 + $0xe8] sm:$0xff]
    %v422 = vld [vmem:[#allocation8 + $0xf0] sm:$0xff]
    %v423 = vld [vmem:[#allocation8 + $0xf8] sm:$0xff]
    %v424 = vld [vmem:[#allocation8 + $0x100] sm:$0xff]
    %v425 = vld [vmem:[#allocation8 + $0x108] sm:$0xff]
    %v426 = vld [vmem:[#allocation8 + $0x110] sm:$0xff]
    %v427 = vld [vmem:[#allocation8 + $0x118] sm:$0xff]
    %v428 = vld [vmem:[#allocation8 + $0x120] sm:$0xff]
    %v429 = vld [vmem:[#allocation8 + $0x128] sm:$0xff]
    %v430 = vld [vmem:[#allocation8 + $0x130] sm:$0xff]
    %v431 = vld [vmem:[#allocation8 + $0x138] sm:$0xff]
    %v432 = vld [vmem:[#allocation8 + $0x140] sm:$0xff]
    %v433 = vld [vmem:[#allocation8 + $0x148] sm:$0xff]
    %v434 = vld [vmem:[#allocation8 + $0x150] sm:$0xff]
    %v435 = vld [vmem:[#allocation8 + $0x158] sm:$0xff]
    %v436 = vld [vmem:[#allocation8 + $0x160] sm:$0xff]
    %v437 = vld [vmem:[#allocation8 + $0x168] sm:$0xff]
    %v438 = vld [vmem:[#allocation8 + $0x170] sm:$0xff]
    %v439 = vld [vmem:[#allocation8 + $0x178] sm:$0xff]
    %v440 = vld [vmem:[#allocation8 + $0x180] sm:$0xff]
    %v441 = vld [vmem:[#allocation8 + $0x188] sm:$0xff]
    %v442 = vld [vmem:[#allocation8 + $0x190] sm:$0xff]
    %v443 = vld [vmem:[#allocation8 + $0x198] sm:$0xff]
    %v444 = vld [vmem:[#allocation8 + $0x1a0] sm:$0xff]
    %v445 = vld [vmem:[#allocation8 + $0x1a8] sm:$0xff]
    %v446 = vld [vmem:[#allocation8 + $0x1b0] sm:$0xff]
    %v447 = vld [vmem:[#allocation8 + $0x1b8] sm:$0xff]
    %v448 = vld [vmem:[#allocation8 + $0x1c0] sm:$0xff]
    %v449 = vld [vmem:[#allocation8 + $0x1c8] sm:$0xff]
    %v450 = vld [vmem:[#allocation8 + $0x1d0] sm:$0xff]
    %v451 = vld [vmem:[#allocation8 + $0x1d8] sm:$0xff]
    %v452 = vld [vmem:[#allocation8 + $0x1e0] sm:$0xff]
    %v453 = vld [vmem:[#allocation8 + $0x1e8] sm:$0xff]
    %v454 = vld [vmem:[#allocation8 + $0x1f0] sm:$0xff]
    %v455 = vld [vmem:[#allocation8 + $0x1f8] sm:$0xff]
    %v456 = vld [vmem:[#allocation8 + $0x200] sm:$0xff]
    %v457 = vld [vmem:[#allocation8 + $0x208] sm:$0xff]
    %v458 = vld [vmem:[#allocation8 + $0x210] sm:$0xff]
    %v459 = vld [vmem:[#allocation8 + $0x218] sm:$0xff]
    %v460 = vld [vmem:[#allocation8 + $0x220] sm:$0xff]
    %v461 = vld [vmem:[#allocation8 + $0x228] sm:$0xff]
    %v462 = vld [vmem:[#allocation8 + $0x230] sm:$0xff]
    %v463 = vld [vmem:[#allocation8 + $0x238] sm:$0xff]
    %v464 = vld [vmem:[#allocation8 + $0x240] sm:$0xff]
    %v465 = vld [vmem:[#allocation8 + $0x248] sm:$0xff]
    %v466 = vld [vmem:[#allocation8 + $0x250] sm:$0xff]
    %v467 = vld [vmem:[#allocation8 + $0x258] sm:$0xff]
    %v468 = vld [vmem:[#allocation8 + $0x260] sm:$0xff]
    %v469 = vld [vmem:[#allocation8 + $0x268] sm:$0xff]
    %v470 = vld [vmem:[#allocation8 + $0x270] sm:$0xff]
    %v471 = vld [vmem:[#allocation8 + $0x278] sm:$0xff]
    %v472 = vld [vmem:[#allocation8 + $0x280] sm:$0xff]
    %v473 = vld [vmem:[#allocation8 + $0x288] sm:$0xff]
    %v474 = vld [vmem:[#allocation8 + $0x290] sm:$0xff]
    %v475 = vld [vmem:[#allocation8 + $0x298] sm:$0xff]
    %v476 = vld [vmem:[#allocation8 + $0x2a0] sm:$0xff]
    %v477 = vld [vmem:[#allocation8 + $0x2a8] sm:$0xff]
    %v478 = vld [vmem:[#allocation8 + $0x2b0] sm:$0xff]
    %v479 = vld [vmem:[#allocation8 + $0x2b8] sm:$0xff]
    %v480 = vld [vmem:[#allocation8 + $0x2c0] sm:$0xff]
    %v481 = vld [vmem:[#allocation8 + $0x2c8] sm:$0xff]
    %v482 = vld [vmem:[#allocation8 + $0x2d0] sm:$0xff]
    %v483 = vld [vmem:[#allocation8 + $0x2d8] sm:$0xff]
    %v484 = vld [vmem:[#allocation8 + $0x2e0] sm:$0xff]
    %v485 = vld [vmem:[#allocation8 + $0x2e8] sm:$0xff]
    %v486 = vld [vmem:[#allocation8 + $0x2f0] sm:$0xff]
    %v487 = vld [vmem:[#allocation8 + $0x2f8] sm:$0xff]
    %v488 = vld [vmem:[#allocation8 + $0x300] sm:$0xff]
    %v489 = vld [vmem:[#allocation8 + $0x308] sm:$0xff]
    %v490 = vld [vmem:[#allocation8 + $0x310] sm:$0xff]
    %v491 = vld [vmem:[#allocation8 + $0x318] sm:$0xff]
    %v492 = vld [vmem:[#allocation8 + $0x320] sm:$0xff]
    %v493 = vld [vmem:[#allocation8 + $0x328] sm:$0xff]
    %v494 = vld [vmem:[#allocation8 + $0x330] sm:$0xff]
    %v495 = vld [vmem:[#allocation8 + $0x338] sm:$0xff]
    %v496 = vld [vmem:[#allocation8 + $0x340] sm:$0xff]
    %v497 = vld [vmem:[#allocation8 + $0x348] sm:$0xff]
    %v498 = vld [vmem:[#allocation8 + $0x350] sm:$0xff]
    %v499 = vld [vmem:[#allocation8 + $0x358] sm:$0xff]
    %v500 = vld [vmem:[#allocation8 + $0x360] sm:$0xff]
    %v501 = vld [vmem:[#allocation8 + $0x368] sm:$0xff]
    %v502 = vld [vmem:[#allocation8 + $0x370] sm:$0xff]
    %v503 = vld [vmem:[#allocation8 + $0x378] sm:$0xff]
    %v504 = vld [vmem:[#allocation8 + $0x380] sm:$0xff]
    %v505 = vld [vmem:[#allocation8 + $0x388] sm:$0xff]
    %v506 = vld [vmem:[#allocation8 + $0x390] sm:$0xff]
    %v507 = vld [vmem:[#allocation8 + $0x398] sm:$0xff]
    %v508 = vld [vmem:[#allocation8 + $0x3a0] sm:$0xff]
    %v509 = vld [vmem:[#allocation8 + $0x3a8] sm:$0xff]
    %v510 = vld [vmem:[#allocation8 + $0x3b0] sm:$0xff]
    %v511 = vld [vmem:[#allocation8 + $0x3b8] sm:$0xff]
    %v512 = vld [vmem:[#allocation8 + $0x3c0] sm:$0xff]
    %v513 = vld [vmem:[#allocation8 + $0x3c8] sm:$0xff]
    %v514 = vld [vmem:[#allocation8 + $0x3d0] sm:$0xff]
    %v515 = vld [vmem:[#allocation8 + $0x3d8] sm:$0xff]
    %v516 = vld [vmem:[#allocation8 + $0x3e0] sm:$0xff]
    %v517 = vld [vmem:[#allocation8 + $0x3e8] sm:$0xff]
    %v518 = vld [vmem:[#allocation8 + $0x3f0] sm:$0xff]
    %v519 = vld [vmem:[#allocation8 + $0x3f8] sm:$0xff]
    %v520 = vld [vmem:[#allocation8 + $0x400] sm:$0xff]
    %v521 = vld [vmem:[#allocation8 + $0x408] sm:$0xff]
    %v522 = vld [vmem:[#allocation8 + $0x410] sm:$0xff]
    %v523 = vld [vmem:[#allocation8 + $0x418] sm:$0xff]
    %v524 = vld [vmem:[#allocation8 + $0x420] sm:$0xff]
    %v525 = vld [vmem:[#allocation8 + $0x428] sm:$0xff]
    %v526 = vld [vmem:[#allocation8 + $0x430] sm:$0xff]
    %v527 = vld [vmem:[#allocation8 + $0x438] sm:$0xff]
    %v528 = vld [vmem:[#allocation8 + $0x440] sm:$0xff]
    %v529 = vld [vmem:[#allocation8 + $0x448] sm:$0xff]
    %v530 = vld [vmem:[#allocation8 + $0x450] sm:$0xff]
    %v531 = vld [vmem:[#allocation8 + $0x458] sm:$0xff]
    %v532 = vld [vmem:[#allocation8 + $0x460] sm:$0xff]
    %v533 = vld [vmem:[#allocation8 + $0x468] sm:$0xff]
    %v534 = vld [vmem:[#allocation8 + $0x470] sm:$0xff]
    %v535 = vld [vmem:[#allocation8 + $0x478] sm:$0xff]
    %v536 = vld [vmem:[#allocation8 + $0x480] sm:$0xff]
    %v537 = vld [vmem:[#allocation8 + $0x488] sm:$0xff]
    %v538 = vld [vmem:[#allocation8 + $0x490] sm:$0xff]
    %v539 = vld [vmem:[#allocation8 + $0x498] sm:$0xff]
    %v540 = vld [vmem:[#allocation8 + $0x4a0] sm:$0xff]
    %v541 = vld [vmem:[#allocation8 + $0x4a8] sm:$0xff]
    %v542 = vld [vmem:[#allocation8 + $0x4b0] sm:$0xff]
    %v543 = vld [vmem:[#allocation8 + $0x4b8] sm:$0xff]
    %v544 = vld [vmem:[#allocation8 + $0x4c0] sm:$0xff]
    %v545 = vld [vmem:[#allocation8 + $0x4c8] sm:$0xff]
    %v546 = vld [vmem:[#allocation8 + $0x4d0] sm:$0xff]
    %v547 = vld [vmem:[#allocation8 + $0x4d8] sm:$0xff]
    %v548 = vld [vmem:[#allocation8 + $0x4e0] sm:$0xff]
    %v549 = vld [vmem:[#allocation8 + $0x4e8] sm:$0xff]
    %v550 = vld [vmem:[#allocation8 + $0x4f0] sm:$0xff]
    %v551 = vld [vmem:[#allocation8 + $0x4f8] sm:$0xff]
    %v552 = vld [vmem:[#allocation8 + $0x500] sm:$0xff]
    %v553 = vld [vmem:[#allocation8 + $0x508] sm:$0xff]
    %v554 = vld [vmem:[#allocation8 + $0x510] sm:$0xff]
    %v555 = vld [vmem:[#allocation8 + $0x518] sm:$0xff]
    %v556 = vld [vmem:[#allocation8 + $0x520] sm:$0xff]
    %v557 = vld [vmem:[#allocation8 + $0x528] sm:$0xff]
    %v558 = vld [vmem:[#allocation8 + $0x530] sm:$0xff]
    %v559 = vld [vmem:[#allocation8 + $0x538] sm:$0xff]
    %v560 = vld [vmem:[#allocation8 + $0x540] sm:$0xff]
    %v561 = vld [vmem:[#allocation8 + $0x548] sm:$0xff]
    %v562 = vld [vmem:[#allocation8 + $0x550] sm:$0xff]
    %v563 = vld [vmem:[#allocation8 + $0x558] sm:$0xff]
    %v564 = vld [vmem:[#allocation8 + $0x560] sm:$0xff]
    %v565 = vld [vmem:[#allocation8 + $0x568] sm:$0xff]
    %v566 = vld [vmem:[#allocation8 + $0x570] sm:$0xff]
    %v567 = vld [vmem:[#allocation8 + $0x578] sm:$0xff]
    %v568 = vld [vmem:[#allocation8 + $0x580] sm:$0xff]
    %v569 = vld [vmem:[#allocation8 + $0x588] sm:$0xff]
    %v570 = vld [vmem:[#allocation8 + $0x590] sm:$0xff]
    %v571 = vld [vmem:[#allocation8 + $0x598] sm:$0xff]
    %v572 = vld [vmem:[#allocation8 + $0x5a0] sm:$0xff]
    %v573 = vld [vmem:[#allocation8 + $0x5a8] sm:$0xff]
    %v574 = vld [vmem:[#allocation8 + $0x5b0] sm:$0xff]
    %v575 = vld [vmem:[#allocation8 + $0x5b8] sm:$0xff]
    %v576 = vld [vmem:[#allocation8 + $0x5c0] sm:$0xff]
    %v577 = vld [vmem:[#allocation8 + $0x5c8] sm:$0xff]
    %v578 = vld [vmem:[#allocation8 + $0x5d0] sm:$0xff]
    %v579 = vld [vmem:[#allocation8 + $0x5d8] sm:$0xff]
    %v580 = vld [vmem:[#allocation8 + $0x5e0] sm:$0xff]
    %v581 = vld [vmem:[#allocation8 + $0x5e8] sm:$0xff]
    %v582 = vld [vmem:[#allocation8 + $0x5f0] sm:$0xff]
    %v583 = vld [vmem:[#allocation8 + $0x5f8] sm:$0xff]
    %v584 = vld [vmem:[#allocation8 + $0x600] sm:$0xff]
    %v585 = vld [vmem:[#allocation8 + $0x608] sm:$0xff]
    %v586 = vld [vmem:[#allocation8 + $0x610] sm:$0xff]
    %v587 = vld [vmem:[#allocation8 + $0x618] sm:$0xff]
    %v588 = vld [vmem:[#allocation8 + $0x620] sm:$0xff]
    %v589 = vld [vmem:[#allocation8 + $0x628] sm:$0xff]
    %v590 = vld [vmem:[#allocation8 + $0x630] sm:$0xff]
    %v591 = vld [vmem:[#allocation8 + $0x638] sm:$0xff]
    %v592 = vld [vmem:[#allocation8 + $0x640] sm:$0xff]
    %v593 = vld [vmem:[#allocation8 + $0x648] sm:$0xff]
    %v594 = vld [vmem:[#allocation8 + $0x650] sm:$0xff]
    %v595 = vld [vmem:[#allocation8 + $0x658] sm:$0xff]
    %v596 = vld [vmem:[#allocation8 + $0x660] sm:$0xff]
    %v597 = vld [vmem:[#allocation8 + $0x668] sm:$0xff]
    %v598 = vld [vmem:[#allocation8 + $0x670] sm:$0xff]
    %v599 = vld [vmem:[#allocation8 + $0x678] sm:$0xff]
    %v600 = vld [vmem:[#allocation8 + $0x680] sm:$0xff]
    %v601 = vld [vmem:[#allocation8 + $0x688] sm:$0xff]
    %v602 = vld [vmem:[#allocation8 + $0x690] sm:$0xff]
    %v603 = vld [vmem:[#allocation8 + $0x698] sm:$0xff]
    %v604 = vld [vmem:[#allocation8 + $0x6a0] sm:$0xff]
    %v605 = vld [vmem:[#allocation8 + $0x6a8] sm:$0xff]
    %v606 = vld [vmem:[#allocation8 + $0x6b0] sm:$0xff]
    %v607 = vld [vmem:[#allocation8 + $0x6b8] sm:$0xff]
    %v608 = vld [vmem:[#allocation8 + $0x6c0] sm:$0xff]
    %v609 = vld [vmem:[#allocation8 + $0x6c8] sm:$0xff]
    %v610 = vld [vmem:[#allocation8 + $0x6d0] sm:$0xff]
    %v611 = vld [vmem:[#allocation8 + $0x6d8] sm:$0xff]
    %v612 = vld [vmem:[#allocation8 + $0x6e0] sm:$0xff]
    %v613 = vld [vmem:[#allocation8 + $0x6e8] sm:$0xff]
    %v614 = vld [vmem:[#allocation8 + $0x6f0] sm:$0xff]
    %v615 = vld [vmem:[#allocation8 + $0x6f8] sm:$0xff]
    %v616 = vld [vmem:[#allocation8 + $0x700] sm:$0xff]
    %v617 = vld [vmem:[#allocation8 + $0x708] sm:$0xff]
    %v618 = vld [vmem:[#allocation8 + $0x710] sm:$0xff]
    %v619 = vld [vmem:[#allocation8 + $0x718] sm:$0xff]
    %v620 = vld [vmem:[#allocation8 + $0x720] sm:$0xff]
    %v621 = vld [vmem:[#allocation8 + $0x728] sm:$0xff]
    %v622 = vld [vmem:[#allocation8 + $0x730] sm:$0xff]
    %v623 = vld [vmem:[#allocation8 + $0x738] sm:$0xff]
    %v624 = vld [vmem:[#allocation8 + $0x740] sm:$0xff]
    %v625 = vld [vmem:[#allocation8 + $0x748] sm:$0xff]
    %v626 = vld [vmem:[#allocation8 + $0x750] sm:$0xff]
    %v627 = vld [vmem:[#allocation8 + $0x758] sm:$0xff]
    %v628 = vld [vmem:[#allocation8 + $0x760] sm:$0xff]
    %v629 = vld [vmem:[#allocation8 + $0x768] sm:$0xff]
    %v630 = vld [vmem:[#allocation8 + $0x770] sm:$0xff]
    %v631 = vld [vmem:[#allocation8 + $0x778] sm:$0xff]
    %v632 = vld [vmem:[#allocation8 + $0x780] sm:$0xff]
    %v633 = vld [vmem:[#allocation8 + $0x788] sm:$0xff]
    %v634 = vld [vmem:[#allocation8 + $0x790] sm:$0xff]
    %v635 = vld [vmem:[#allocation8 + $0x798] sm:$0xff]
    %v636 = vld [vmem:[#allocation8 + $0x7a0] sm:$0xff]
    %v637 = vld [vmem:[#allocation8 + $0x7a8] sm:$0xff]
    %v638 = vld [vmem:[#allocation8 + $0x7b0] sm:$0xff]
    %v639 = vld [vmem:[#allocation8 + $0x7b8] sm:$0xff]
    %v640 = vld [vmem:[#allocation8 + $0x7c0] sm:$0xff]
    %v641 = vld [vmem:[#allocation8 + $0x7c8] sm:$0xff]
    %v642 = vld [vmem:[#allocation8 + $0x7d0] sm:$0xff]
    %v643 = vld [vmem:[#allocation8 + $0x7d8] sm:$0xff]
    %v644 = vld [vmem:[#allocation8 + $0x7e0] sm:$0xff]
    %v645 = vld [vmem:[#allocation8 + $0x7e8] sm:$0xff]
    %v646 = vld [vmem:[#allocation8 + $0x7f0] sm:$0xff]
    %v647 = vld [vmem:[#allocation8 + $0x7f8] sm:$0xff]
    %v648 = vld [vmem:[#allocation8 + $0x800] sm:$0xff]
    %v649 = vld [vmem:[#allocation8 + $0x808] sm:$0xff]
    %v650 = vld [vmem:[#allocation8 + $0x810] sm:$0xff]
    %v651 = vld [vmem:[#allocation8 + $0x818] sm:$0xff]
    %v652 = vld [vmem:[#allocation8 + $0x820] sm:$0xff]
    %v653 = vld [vmem:[#allocation8 + $0x828] sm:$0xff]
    %v654 = vld [vmem:[#allocation8 + $0x830] sm:$0xff]
    %v655 = vld [vmem:[#allocation8 + $0x838] sm:$0xff]
    %v656 = vld [vmem:[#allocation8 + $0x840] sm:$0xff]
    %v657 = vld [vmem:[#allocation8 + $0x848] sm:$0xff]
    %v658 = vld [vmem:[#allocation8 + $0x850] sm:$0xff]
    %v659 = vld [vmem:[#allocation8 + $0x858] sm:$0xff]
    %v660 = vld [vmem:[#allocation8 + $0x860] sm:$0xff]
    %v661 = vld [vmem:[#allocation8 + $0x868] sm:$0xff]
    %v662 = vld [vmem:[#allocation8 + $0x870] sm:$0xff]
    %v663 = vld [vmem:[#allocation8 + $0x878] sm:$0xff]
    %v664 = vld [vmem:[#allocation8 + $0x880] sm:$0xff]
    %v665 = vld [vmem:[#allocation8 + $0x888] sm:$0xff]
    %v666 = vld [vmem:[#allocation8 + $0x890] sm:$0xff]
    %v667 = vld [vmem:[#allocation8 + $0x898] sm:$0xff]
    %v668 = vld [vmem:[#allocation8 + $0x8a0] sm:$0xff]
    %v669 = vld [vmem:[#allocation8 + $0x8a8] sm:$0xff]
    %v670 = vld [vmem:[#allocation8 + $0x8b0] sm:$0xff]
    %v671 = vld [vmem:[#allocation8 + $0x8b8] sm:$0xff]
    %v672 = vld [vmem:[#allocation8 + $0x8c0] sm:$0xff]
    %v673 = vld [vmem:[#allocation8 + $0x8c8] sm:$0xff]
    %v674 = vld [vmem:[#allocation8 + $0x8d0] sm:$0xff]
    %v675 = vld [vmem:[#allocation8 + $0x8d8] sm:$0xff]
    %v676 = vld [vmem:[#allocation8 + $0x8e0] sm:$0xff]
    %v677 = vld [vmem:[#allocation8 + $0x8e8] sm:$0xff]
    %v678 = vld [vmem:[#allocation8 + $0x8f0] sm:$0xff]
    %v679 = vld [vmem:[#allocation8 + $0x8f8] sm:$0xff]
    %v680 = vld [vmem:[#allocation8 + $0x900] sm:$0xff]
    %v681 = vld [vmem:[#allocation8 + $0x908] sm:$0xff]
    %v682 = vld [vmem:[#allocation8 + $0x910] sm:$0xff]
    %v683 = vld [vmem:[#allocation8 + $0x918] sm:$0xff]
    %v684 = vld [vmem:[#allocation8 + $0x920] sm:$0xff]
    %v685 = vld [vmem:[#allocation8 + $0x928] sm:$0xff]
    %v686 = vld [vmem:[#allocation8 + $0x930] sm:$0xff]
    %v687 = vld [vmem:[#allocation8 + $0x938] sm:$0xff]
    %v688 = vld [vmem:[#allocation8 + $0x940] sm:$0xff]
    %v689 = vld [vmem:[#allocation8 + $0x948] sm:$0xff]
    %v690 = vld [vmem:[#allocation8 + $0x950] sm:$0xff]
    %v691 = vld [vmem:[#allocation8 + $0x958] sm:$0xff]
    %v692 = vld [vmem:[#allocation8 + $0x960] sm:$0xff]
    %v693 = vld [vmem:[#allocation8 + $0x968] sm:$0xff]
    %v694 = vld [vmem:[#allocation8 + $0x970] sm:$0xff]
    %v695 = vld [vmem:[#allocation8 + $0x978] sm:$0xff]
    %v696 = vld [vmem:[#allocation8 + $0x980] sm:$0xff]
    %v697 = vld [vmem:[#allocation8 + $0x988] sm:$0xff]
    %v698 = vld [vmem:[#allocation8 + $0x990] sm:$0xff]
    %v699 = vld [vmem:[#allocation8 + $0x998] sm:$0xff]
    %v700 = vld [vmem:[#allocation8 + $0x9a0] sm:$0xff]
    %v701 = vld [vmem:[#allocation8 + $0x9a8] sm:$0xff]
    %v702 = vld [vmem:[#allocation8 + $0x9b0] sm:$0xff]
    %v703 = vld [vmem:[#allocation8 + $0x9b8] sm:$0xff]
    %v704 = vld [vmem:[#allocation8 + $0x9c0] sm:$0xff]
    %v705 = vld [vmem:[#allocation8 + $0x9c8] sm:$0xff]
    %v706 = vld [vmem:[#allocation8 + $0x9d0] sm:$0xff]
    %v707 = vld [vmem:[#allocation8 + $0x9d8] sm:$0xff]
    %v708 = vld [vmem:[#allocation8 + $0x9e0] sm:$0xff]
    %v709 = vld [vmem:[#allocation8 + $0x9e8] sm:$0xff]
    %v710 = vld [vmem:[#allocation8 + $0x9f0] sm:$0xff]
    %v711 = vld [vmem:[#allocation8 + $0x9f8] sm:$0xff]
    %v712 = vld [vmem:[#allocation8 + $0xa00] sm:$0xff]
    %v713 = vld [vmem:[#allocation8 + $0xa08] sm:$0xff]
    %v714 = vld [vmem:[#allocation8 + $0xa10] sm:$0xff]
    %v715 = vld [vmem:[#allocation8 + $0xa18] sm:$0xff]
    %v716 = vld [vmem:[#allocation8 + $0xa20] sm:$0xff]
    %v717 = vld [vmem:[#allocation8 + $0xa28] sm:$0xff]
    %v718 = vld [vmem:[#allocation8 + $0xa30] sm:$0xff]
    %v719 = vld [vmem:[#allocation8 + $0xa38] sm:$0xff]
    %v720 = vld [vmem:[#allocation8 + $0xa40] sm:$0xff]
    %v721 = vld [vmem:[#allocation8 + $0xa48] sm:$0xff]
    %v722 = vld [vmem:[#allocation8 + $0xa50] sm:$0xff]
    %v723 = vld [vmem:[#allocation8 + $0xa58] sm:$0xff]
    %v724 = vld [vmem:[#allocation8 + $0xa60] sm:$0xff]
    %v725 = vld [vmem:[#allocation8 + $0xa68] sm:$0xff]
    %v726 = vld [vmem:[#allocation8 + $0xa70] sm:$0xff]
    %v727 = vld [vmem:[#allocation8 + $0xa78] sm:$0xff]
    %v728 = vld [vmem:[#allocation10] sm:$0x3f]
    %v730 = vlaneseq
    %v731 = vshrl.u32 %v730, 7
    %v732 = vsub.s32 0, %v731
    %v733 = vrot.slane %v728, %v732
    %v734 = vlaneseq
    %v735 = vshrl.u32 %v734, 7
    %v736 = vsub.s32 1, %v735
    %v737 = vrot.slane %v728, %v736
    %v738 = vlaneseq
    %v739 = vshrl.u32 %v738, 7
    %v740 = vsub.s32 2, %v739
    %v741 = vrot.slane %v728, %v740
    %v742 = vlaneseq
    %v743 = vshrl.u32 %v742, 7
    %v744 = vsub.s32 3, %v743
    %v745 = vrot.slane %v728, %v744
    %v746 = vlaneseq
    %v747 = vshrl.u32 %v746, 7
    %v748 = vsub.s32 4, %v747
    %v749 = vrot.slane %v728, %v748
    %v750 = vlaneseq
    %v751 = vshrl.u32 %v750, 7
    %v752 = vsub.s32 5, %v751
    %v753 = vrot.slane %v728, %v752
    %v1096 = vunpack.c.l.b16 %v392
    %v1097 = vunpack.c.h.b16 %v392
    %v1098 = vunpack.c.l.b16 %v393
    %v1099 = vunpack.c.h.b16 %v393
    %v1100 = vunpack.c.l.b16 %v394
    %v1101 = vunpack.c.h.b16 %v394
    %v1102 = vunpack.c.l.b16 %v395
    %v1103 = vunpack.c.h.b16 %v395
    %v1104 = vunpack.c.l.b16 %v396
    %v1105 = vunpack.c.h.b16 %v396
    %v1106 = vunpack.c.l.b16 %v397
    %v1107 = vunpack.c.h.b16 %v397
    %v1108 = vunpack.c.l.b16 %v398
    %v1109 = vunpack.c.h.b16 %v398
    %v1110 = vunpack.c.l.b16 %v399
    %v1111 = vunpack.c.h.b16 %v399
    %v1112 = vunpack.c.l.b16 %v400
    %v1113 = vunpack.c.h.b16 %v400
    %v1114 = vunpack.c.l.b16 %v401
    %v1115 = vunpack.c.h.b16 %v401
    %v1116 = vunpack.c.l.b16 %v402
    %v1117 = vunpack.c.h.b16 %v402
    %v1118 = vunpack.c.l.b16 %v403
    %v1119 = vunpack.c.h.b16 %v403
    %v1120 = vunpack.c.l.b16 %v404
    %v1121 = vunpack.c.h.b16 %v404
    %v1122 = vunpack.c.l.b16 %v405
    %v1123 = vunpack.c.h.b16 %v405
    %v1124 = vunpack.c.l.b16 %v406
    %v1125 = vunpack.c.h.b16 %v406
    %v1126 = vunpack.c.l.b16 %v407
    %v1127 = vunpack.c.h.b16 %v407
    %v1128 = vunpack.c.l.b16 %v408
    %v1129 = vunpack.c.h.b16 %v408
    %v1130 = vunpack.c.l.b16 %v409
    %v1131 = vunpack.c.h.b16 %v409
    %v1132 = vunpack.c.l.b16 %v410
    %v1133 = vunpack.c.h.b16 %v410
    %v1134 = vunpack.c.l.b16 %v411
    %v1135 = vunpack.c.h.b16 %v411
    %v1136 = vunpack.c.l.b16 %v412
    %v1137 = vunpack.c.h.b16 %v412
    %v1138 = vunpack.c.l.b16 %v413
    %v1139 = vunpack.c.h.b16 %v413
    %v1140 = vunpack.c.l.b16 %v414
    %v1141 = vunpack.c.h.b16 %v414
    %v1142 = vunpack.c.l.b16 %v415
    %v1143 = vunpack.c.h.b16 %v415
    %v1144 = vunpack.c.l.b16 %v416
    %v1145 = vunpack.c.h.b16 %v416
    %v1146 = vunpack.c.l.b16 %v417
    %v1147 = vunpack.c.h.b16 %v417
    %v1148 = vunpack.c.l.b16 %v418
    %v1149 = vunpack.c.h.b16 %v418
    %v1150 = vunpack.c.l.b16 %v419
    %v1151 = vunpack.c.h.b16 %v419
    %v1152 = vunpack.c.l.b16 %v420
    %v1153 = vunpack.c.h.b16 %v420
    %v1154 = vunpack.c.l.b16 %v421
    %v1155 = vunpack.c.h.b16 %v421
    %v1156 = vunpack.c.l.b16 %v422
    %v1157 = vunpack.c.h.b16 %v422
    %v1158 = vunpack.c.l.b16 %v423
    %v1159 = vunpack.c.h.b16 %v423
    %v1160 = vunpack.c.l.b16 %v424
    %v1161 = vunpack.c.h.b16 %v424
    %v1162 = vunpack.c.l.b16 %v425
    %v1163 = vunpack.c.h.b16 %v425
    %v1164 = vunpack.c.l.b16 %v426
    %v1165 = vunpack.c.h.b16 %v426
    %v1166 = vunpack.c.l.b16 %v427
    %v1167 = vunpack.c.h.b16 %v427
    %v1168 = vunpack.c.l.b16 %v428
    %v1169 = vunpack.c.h.b16 %v428
    %v1170 = vunpack.c.l.b16 %v429
    %v1171 = vunpack.c.h.b16 %v429
    %v1172 = vunpack.c.l.b16 %v430
    %v1173 = vunpack.c.h.b16 %v430
    %v1174 = vunpack.c.l.b16 %v431
    %v1175 = vunpack.c.h.b16 %v431
    %v1176 = vunpack.c.l.b16 %v432
    %v1177 = vunpack.c.h.b16 %v432
    %v1178 = vunpack.c.l.b16 %v433
    %v1179 = vunpack.c.h.b16 %v433
    %v1180 = vunpack.c.l.b16 %v434
    %v1181 = vunpack.c.h.b16 %v434
    %v1182 = vunpack.c.l.b16 %v435
    %v1183 = vunpack.c.h.b16 %v435
    %v1184 = vunpack.c.l.b16 %v436
    %v1185 = vunpack.c.h.b16 %v436
    %v1186 = vunpack.c.l.b16 %v437
    %v1187 = vunpack.c.h.b16 %v437
    %v1188 = vunpack.c.l.b16 %v438
    %v1189 = vunpack.c.h.b16 %v438
    %v1190 = vunpack.c.l.b16 %v439
    %v1191 = vunpack.c.h.b16 %v439
    %v1192 = vunpack.c.l.b16 %v440
    %v1193 = vunpack.c.h.b16 %v440
    %v1194 = vunpack.c.l.b16 %v441
    %v1195 = vunpack.c.h.b16 %v441
    %v1196 = vunpack.c.l.b16 %v442
    %v1197 = vunpack.c.h.b16 %v442
    %v1198 = vunpack.c.l.b16 %v443
    %v1199 = vunpack.c.h.b16 %v443
    %v1200 = vunpack.c.l.b16 %v444
    %v1201 = vunpack.c.h.b16 %v444
    %v1202 = vunpack.c.l.b16 %v445
    %v1203 = vunpack.c.h.b16 %v445
    %v1204 = vunpack.c.l.b16 %v446
    %v1205 = vunpack.c.h.b16 %v446
    %v1206 = vunpack.c.l.b16 %v447
    %v1207 = vunpack.c.h.b16 %v447
    %v1208 = vunpack.c.l.b16 %v448
    %v1209 = vunpack.c.h.b16 %v448
    %v1210 = vunpack.c.l.b16 %v449
    %v1211 = vunpack.c.h.b16 %v449
    %v1212 = vunpack.c.l.b16 %v450
    %v1213 = vunpack.c.h.b16 %v450
    %v1214 = vunpack.c.l.b16 %v451
    %v1215 = vunpack.c.h.b16 %v451
    %v1216 = vunpack.c.l.b16 %v452
    %v1217 = vunpack.c.h.b16 %v452
    %v1218 = vunpack.c.l.b16 %v453
    %v1219 = vunpack.c.h.b16 %v453
    %v1220 = vunpack.c.l.b16 %v454
    %v1221 = vunpack.c.h.b16 %v454
    %v1222 = vunpack.c.l.b16 %v455
    %v1223 = vunpack.c.h.b16 %v455
    %v1224 = vunpack.c.l.b16 %v456
    %v1225 = vunpack.c.h.b16 %v456
    %v1226 = vunpack.c.l.b16 %v457
    %v1227 = vunpack.c.h.b16 %v457
    %v1228 = vunpack.c.l.b16 %v458
    %v1229 = vunpack.c.h.b16 %v458
    %v1230 = vunpack.c.l.b16 %v459
    %v1231 = vunpack.c.h.b16 %v459
    %v1232 = vunpack.c.l.b16 %v460
    %v1233 = vunpack.c.h.b16 %v460
    %v1234 = vunpack.c.l.b16 %v461
    %v1235 = vunpack.c.h.b16 %v461
    %v1236 = vunpack.c.l.b16 %v462
    %v1237 = vunpack.c.h.b16 %v462
    %v1238 = vunpack.c.l.b16 %v463
    %v1239 = vunpack.c.h.b16 %v463
    %v1240 = vunpack.c.l.b16 %v464
    %v1241 = vunpack.c.h.b16 %v464
    %v1242 = vunpack.c.l.b16 %v465
    %v1243 = vunpack.c.h.b16 %v465
    %v1244 = vunpack.c.l.b16 %v466
    %v1245 = vunpack.c.h.b16 %v466
    %v1246 = vunpack.c.l.b16 %v467
    %v1247 = vunpack.c.h.b16 %v467
    %v1248 = vunpack.c.l.b16 %v468
    %v1249 = vunpack.c.h.b16 %v468
    %v1250 = vunpack.c.l.b16 %v469
    %v1251 = vunpack.c.h.b16 %v469
    %v1252 = vunpack.c.l.b16 %v470
    %v1253 = vunpack.c.h.b16 %v470
    %v1254 = vunpack.c.l.b16 %v471
    %v1255 = vunpack.c.h.b16 %v471
    %v1256 = vunpack.c.l.b16 %v472
    %v1257 = vunpack.c.h.b16 %v472
    %v1258 = vunpack.c.l.b16 %v473
    %v1259 = vunpack.c.h.b16 %v473
    %v1260 = vunpack.c.l.b16 %v474
    %v1261 = vunpack.c.h.b16 %v474
    %v1262 = vunpack.c.l.b16 %v475
    %v1263 = vunpack.c.h.b16 %v475
    %v1264 = vunpack.c.l.b16 %v476
    %v1265 = vunpack.c.h.b16 %v476
    %v1266 = vunpack.c.l.b16 %v477
    %v1267 = vunpack.c.h.b16 %v477
    %v1268 = vunpack.c.l.b16 %v478
    %v1269 = vunpack.c.h.b16 %v478
    %v1270 = vunpack.c.l.b16 %v479
    %v1271 = vunpack.c.h.b16 %v479
    %v1272 = vunpack.c.l.b16 %v480
    %v1273 = vunpack.c.h.b16 %v480
    %v1274 = vunpack.c.l.b16 %v481
    %v1275 = vunpack.c.h.b16 %v481
    %v1276 = vunpack.c.l.b16 %v482
    %v1277 = vunpack.c.h.b16 %v482
    %v1278 = vunpack.c.l.b16 %v483
    %v1279 = vunpack.c.h.b16 %v483
    %v1280 = vunpack.c.l.b16 %v484
    %v1281 = vunpack.c.h.b16 %v484
    %v1282 = vunpack.c.l.b16 %v485
    %v1283 = vunpack.c.h.b16 %v485
    %v1284 = vunpack.c.l.b16 %v486
    %v1285 = vunpack.c.h.b16 %v486
    %v1286 = vunpack.c.l.b16 %v487
    %v1287 = vunpack.c.h.b16 %v487
    %v1288 = vunpack.c.l.b16 %v488
    %v1289 = vunpack.c.h.b16 %v488
    %v1290 = vunpack.c.l.b16 %v489
    %v1291 = vunpack.c.h.b16 %v489
    %v1292 = vunpack.c.l.b16 %v490
    %v1293 = vunpack.c.h.b16 %v490
    %v1294 = vunpack.c.l.b16 %v491
    %v1295 = vunpack.c.h.b16 %v491
    %v1296 = vunpack.c.l.b16 %v492
    %v1297 = vunpack.c.h.b16 %v492
    %v1298 = vunpack.c.l.b16 %v493
    %v1299 = vunpack.c.h.b16 %v493
    %v1300 = vunpack.c.l.b16 %v494
    %v1301 = vunpack.c.h.b16 %v494
    %v1302 = vunpack.c.l.b16 %v495
    %v1303 = vunpack.c.h.b16 %v495
    %v1304 = vunpack.c.l.b16 %v496
    %v1305 = vunpack.c.h.b16 %v496
    %v1306 = vunpack.c.l.b16 %v497
    %v1307 = vunpack.c.h.b16 %v497
    %v1308 = vunpack.c.l.b16 %v498
    %v1309 = vunpack.c.h.b16 %v498
    %v1310 = vunpack.c.l.b16 %v499
    %v1311 = vunpack.c.h.b16 %v499
    %v1312 = vunpack.c.l.b16 %v500
    %v1313 = vunpack.c.h.b16 %v500
    %v1314 = vunpack.c.l.b16 %v501
    %v1315 = vunpack.c.h.b16 %v501
    %v1316 = vunpack.c.l.b16 %v502
    %v1317 = vunpack.c.h.b16 %v502
    %v1318 = vunpack.c.l.b16 %v503
    %v1319 = vunpack.c.h.b16 %v503
    %v1320 = vunpack.c.l.b16 %v504
    %v1321 = vunpack.c.h.b16 %v504
    %v1322 = vunpack.c.l.b16 %v505
    %v1323 = vunpack.c.h.b16 %v505
    %v1324 = vunpack.c.l.b16 %v506
    %v1325 = vunpack.c.h.b16 %v506
    %v1326 = vunpack.c.l.b16 %v507
    %v1327 = vunpack.c.h.b16 %v507
    %v1328 = vunpack.c.l.b16 %v508
    %v1329 = vunpack.c.h.b16 %v508
    %v1330 = vunpack.c.l.b16 %v509
    %v1331 = vunpack.c.h.b16 %v509
    %v1332 = vunpack.c.l.b16 %v510
    %v1333 = vunpack.c.h.b16 %v510
    %v1334 = vunpack.c.l.b16 %v511
    %v1335 = vunpack.c.h.b16 %v511
    %v1336 = vunpack.c.l.b16 %v512
    %v1337 = vunpack.c.h.b16 %v512
    %v1338 = vunpack.c.l.b16 %v513
    %v1339 = vunpack.c.h.b16 %v513
    %v1340 = vunpack.c.l.b16 %v514
    %v1341 = vunpack.c.h.b16 %v514
    %v1342 = vunpack.c.l.b16 %v515
    %v1343 = vunpack.c.h.b16 %v515
    %v1344 = vunpack.c.l.b16 %v516
    %v1345 = vunpack.c.h.b16 %v516
    %v1346 = vunpack.c.l.b16 %v517
    %v1347 = vunpack.c.h.b16 %v517
    %v1348 = vunpack.c.l.b16 %v518
    %v1349 = vunpack.c.h.b16 %v518
    %v1350 = vunpack.c.l.b16 %v519
    %v1351 = vunpack.c.h.b16 %v519
    %v1352 = vunpack.c.l.b16 %v520
    %v1353 = vunpack.c.h.b16 %v520
    %v1354 = vunpack.c.l.b16 %v521
    %v1355 = vunpack.c.h.b16 %v521
    %v1356 = vunpack.c.l.b16 %v522
    %v1357 = vunpack.c.h.b16 %v522
    %v1358 = vunpack.c.l.b16 %v523
    %v1359 = vunpack.c.h.b16 %v523
    %v1360 = vunpack.c.l.b16 %v524
    %v1361 = vunpack.c.h.b16 %v524
    %v1362 = vunpack.c.l.b16 %v525
    %v1363 = vunpack.c.h.b16 %v525
    %v1364 = vunpack.c.l.b16 %v526
    %v1365 = vunpack.c.h.b16 %v526
    %v1366 = vunpack.c.l.b16 %v527
    %v1367 = vunpack.c.h.b16 %v527
    %v1368 = vunpack.c.l.b16 %v528
    %v1369 = vunpack.c.h.b16 %v528
    %v1370 = vunpack.c.l.b16 %v529
    %v1371 = vunpack.c.h.b16 %v529
    %v1372 = vunpack.c.l.b16 %v530
    %v1373 = vunpack.c.h.b16 %v530
    %v1374 = vunpack.c.l.b16 %v531
    %v1375 = vunpack.c.h.b16 %v531
    %v1376 = vunpack.c.l.b16 %v532
    %v1377 = vunpack.c.h.b16 %v532
    %v1378 = vunpack.c.l.b16 %v533
    %v1379 = vunpack.c.h.b16 %v533
    %v1380 = vunpack.c.l.b16 %v534
    %v1381 = vunpack.c.h.b16 %v534
    %v1382 = vunpack.c.l.b16 %v535
    %v1383 = vunpack.c.h.b16 %v535
    %v1384 = vunpack.c.l.b16 %v536
    %v1385 = vunpack.c.h.b16 %v536
    %v1386 = vunpack.c.l.b16 %v537
    %v1387 = vunpack.c.h.b16 %v537
    %v1388 = vunpack.c.l.b16 %v538
    %v1389 = vunpack.c.h.b16 %v538
    %v1390 = vunpack.c.l.b16 %v539
    %v1391 = vunpack.c.h.b16 %v539
    %v1392 = vunpack.c.l.b16 %v540
    %v1393 = vunpack.c.h.b16 %v540
    %v1394 = vunpack.c.l.b16 %v541
    %v1395 = vunpack.c.h.b16 %v541
    %v1396 = vunpack.c.l.b16 %v542
    %v1397 = vunpack.c.h.b16 %v542
    %v1398 = vunpack.c.l.b16 %v543
    %v1399 = vunpack.c.h.b16 %v543
    %v1400 = vunpack.c.l.b16 %v544
    %v1401 = vunpack.c.h.b16 %v544
    %v1402 = vunpack.c.l.b16 %v545
    %v1403 = vunpack.c.h.b16 %v545
    %v1404 = vunpack.c.l.b16 %v546
    %v1405 = vunpack.c.h.b16 %v546
    %v1406 = vunpack.c.l.b16 %v547
    %v1407 = vunpack.c.h.b16 %v547
    %v1408 = vunpack.c.l.b16 %v548
    %v1409 = vunpack.c.h.b16 %v548
    %v1410 = vunpack.c.l.b16 %v549
    %v1411 = vunpack.c.h.b16 %v549
    %v1412 = vunpack.c.l.b16 %v550
    %v1413 = vunpack.c.h.b16 %v550
    %v1414 = vunpack.c.l.b16 %v551
    %v1415 = vunpack.c.h.b16 %v551
    %v1416 = vunpack.c.l.b16 %v552
    %v1417 = vunpack.c.h.b16 %v552
    %v1418 = vunpack.c.l.b16 %v553
    %v1419 = vunpack.c.h.b16 %v553
    %v1420 = vunpack.c.l.b16 %v554
    %v1421 = vunpack.c.h.b16 %v554
    %v1422 = vunpack.c.l.b16 %v555
    %v1423 = vunpack.c.h.b16 %v555
    %v1424 = vunpack.c.l.b16 %v556
    %v1425 = vunpack.c.h.b16 %v556
    %v1426 = vunpack.c.l.b16 %v557
    %v1427 = vunpack.c.h.b16 %v557
    %v1428 = vunpack.c.l.b16 %v558
    %v1429 = vunpack.c.h.b16 %v558
    %v1430 = vunpack.c.l.b16 %v559
    %v1431 = vunpack.c.h.b16 %v559
    %v1432 = vunpack.c.l.b16 %v560
    %v1433 = vunpack.c.h.b16 %v560
    %v1434 = vunpack.c.l.b16 %v561
    %v1435 = vunpack.c.h.b16 %v561
    %v1436 = vunpack.c.l.b16 %v562
    %v1437 = vunpack.c.h.b16 %v562
    %v1438 = vunpack.c.l.b16 %v563
    %v1439 = vunpack.c.h.b16 %v563
    %v1440 = vunpack.c.l.b16 %v564
    %v1441 = vunpack.c.h.b16 %v564
    %v1442 = vunpack.c.l.b16 %v565
    %v1443 = vunpack.c.h.b16 %v565
    %v1444 = vunpack.c.l.b16 %v566
    %v1445 = vunpack.c.h.b16 %v566
    %v1446 = vunpack.c.l.b16 %v567
    %v1447 = vunpack.c.h.b16 %v567
    %v1448 = vunpack.c.l.b16 %v568
    %v1449 = vunpack.c.h.b16 %v568
    %v1450 = vunpack.c.l.b16 %v569
    %v1451 = vunpack.c.h.b16 %v569
    %v1452 = vunpack.c.l.b16 %v570
    %v1453 = vunpack.c.h.b16 %v570
    %v1454 = vunpack.c.l.b16 %v571
    %v1455 = vunpack.c.h.b16 %v571
    %v1456 = vunpack.c.l.b16 %v572
    %v1457 = vunpack.c.h.b16 %v572
    %v1458 = vunpack.c.l.b16 %v573
    %v1459 = vunpack.c.h.b16 %v573
    %v1460 = vunpack.c.l.b16 %v574
    %v1461 = vunpack.c.h.b16 %v574
    %v1462 = vunpack.c.l.b16 %v575
    %v1463 = vunpack.c.h.b16 %v575
    %v1464 = vunpack.c.l.b16 %v576
    %v1465 = vunpack.c.h.b16 %v576
    %v1466 = vunpack.c.l.b16 %v577
    %v1467 = vunpack.c.h.b16 %v577
    %v1468 = vunpack.c.l.b16 %v578
    %v1469 = vunpack.c.h.b16 %v578
    %v1470 = vunpack.c.l.b16 %v579
    %v1471 = vunpack.c.h.b16 %v579
    %v1472 = vunpack.c.l.b16 %v580
    %v1473 = vunpack.c.h.b16 %v580
    %v1474 = vunpack.c.l.b16 %v581
    %v1475 = vunpack.c.h.b16 %v581
    %v1476 = vunpack.c.l.b16 %v582
    %v1477 = vunpack.c.h.b16 %v582
    %v1478 = vunpack.c.l.b16 %v583
    %v1479 = vunpack.c.h.b16 %v583
    %v1480 = vunpack.c.l.b16 %v584
    %v1481 = vunpack.c.h.b16 %v584
    %v1482 = vunpack.c.l.b16 %v585
    %v1483 = vunpack.c.h.b16 %v585
    %v1484 = vunpack.c.l.b16 %v586
    %v1485 = vunpack.c.h.b16 %v586
    %v1486 = vunpack.c.l.b16 %v587
    %v1487 = vunpack.c.h.b16 %v587
    %v1488 = vunpack.c.l.b16 %v588
    %v1489 = vunpack.c.h.b16 %v588
    %v1490 = vunpack.c.l.b16 %v589
    %v1491 = vunpack.c.h.b16 %v589
    %v1492 = vunpack.c.l.b16 %v590
    %v1493 = vunpack.c.h.b16 %v590
    %v1494 = vunpack.c.l.b16 %v591
    %v1495 = vunpack.c.h.b16 %v591
    %v1496 = vunpack.c.l.b16 %v592
    %v1497 = vunpack.c.h.b16 %v592
    %v1498 = vunpack.c.l.b16 %v593
    %v1499 = vunpack.c.h.b16 %v593
    %v1500 = vunpack.c.l.b16 %v594
    %v1501 = vunpack.c.h.b16 %v594
    %v1502 = vunpack.c.l.b16 %v595
    %v1503 = vunpack.c.h.b16 %v595
    %v1504 = vunpack.c.l.b16 %v596
    %v1505 = vunpack.c.h.b16 %v596
    %v1506 = vunpack.c.l.b16 %v597
    %v1507 = vunpack.c.h.b16 %v597
    %v1508 = vunpack.c.l.b16 %v598
    %v1509 = vunpack.c.h.b16 %v598
    %v1510 = vunpack.c.l.b16 %v599
    %v1511 = vunpack.c.h.b16 %v599
    %v1512 = vunpack.c.l.b16 %v600
    %v1513 = vunpack.c.h.b16 %v600
    %v1514 = vunpack.c.l.b16 %v601
    %v1515 = vunpack.c.h.b16 %v601
    %v1516 = vunpack.c.l.b16 %v602
    %v1517 = vunpack.c.h.b16 %v602
    %v1518 = vunpack.c.l.b16 %v603
    %v1519 = vunpack.c.h.b16 %v603
    %v1520 = vunpack.c.l.b16 %v604
    %v1521 = vunpack.c.h.b16 %v604
    %v1522 = vunpack.c.l.b16 %v605
    %v1523 = vunpack.c.h.b16 %v605
    %v1524 = vunpack.c.l.b16 %v606
    %v1525 = vunpack.c.h.b16 %v606
    %v1526 = vunpack.c.l.b16 %v607
    %v1527 = vunpack.c.h.b16 %v607
    %v1528 = vunpack.c.l.b16 %v608
    %v1529 = vunpack.c.h.b16 %v608
    %v1530 = vunpack.c.l.b16 %v609
    %v1531 = vunpack.c.h.b16 %v609
    %v1532 = vunpack.c.l.b16 %v610
    %v1533 = vunpack.c.h.b16 %v610
    %v1534 = vunpack.c.l.b16 %v611
    %v1535 = vunpack.c.h.b16 %v611
    %v1536 = vunpack.c.l.b16 %v612
    %v1537 = vunpack.c.h.b16 %v612
    %v1538 = vunpack.c.l.b16 %v613
    %v1539 = vunpack.c.h.b16 %v613
    %v1540 = vunpack.c.l.b16 %v614
    %v1541 = vunpack.c.h.b16 %v614
    %v1542 = vunpack.c.l.b16 %v615
    %v1543 = vunpack.c.h.b16 %v615
    %v1544 = vunpack.c.l.b16 %v616
    %v1545 = vunpack.c.h.b16 %v616
    %v1546 = vunpack.c.l.b16 %v617
    %v1547 = vunpack.c.h.b16 %v617
    %v1548 = vunpack.c.l.b16 %v618
    %v1549 = vunpack.c.h.b16 %v618
    %v1550 = vunpack.c.l.b16 %v619
    %v1551 = vunpack.c.h.b16 %v619
    %v1552 = vunpack.c.l.b16 %v620
    %v1553 = vunpack.c.h.b16 %v620
    %v1554 = vunpack.c.l.b16 %v621
    %v1555 = vunpack.c.h.b16 %v621
    %v1556 = vunpack.c.l.b16 %v622
    %v1557 = vunpack.c.h.b16 %v622
    %v1558 = vunpack.c.l.b16 %v623
    %v1559 = vunpack.c.h.b16 %v623
    %v1560 = vunpack.c.l.b16 %v624
    %v1561 = vunpack.c.h.b16 %v624
    %v1562 = vunpack.c.l.b16 %v625
    %v1563 = vunpack.c.h.b16 %v625
    %v1564 = vunpack.c.l.b16 %v626
    %v1565 = vunpack.c.h.b16 %v626
    %v1566 = vunpack.c.l.b16 %v627
    %v1567 = vunpack.c.h.b16 %v627
    %v1568 = vunpack.c.l.b16 %v628
    %v1569 = vunpack.c.h.b16 %v628
    %v1570 = vunpack.c.l.b16 %v629
    %v1571 = vunpack.c.h.b16 %v629
    %v1572 = vunpack.c.l.b16 %v630
    %v1573 = vunpack.c.h.b16 %v630
    %v1574 = vunpack.c.l.b16 %v631
    %v1575 = vunpack.c.h.b16 %v631
    %v1576 = vunpack.c.l.b16 %v632
    %v1577 = vunpack.c.h.b16 %v632
    %v1578 = vunpack.c.l.b16 %v633
    %v1579 = vunpack.c.h.b16 %v633
    %v1580 = vunpack.c.l.b16 %v634
    %v1581 = vunpack.c.h.b16 %v634
    %v1582 = vunpack.c.l.b16 %v635
    %v1583 = vunpack.c.h.b16 %v635
    %v1584 = vunpack.c.l.b16 %v636
    %v1585 = vunpack.c.h.b16 %v636
    %v1586 = vunpack.c.l.b16 %v637
    %v1587 = vunpack.c.h.b16 %v637
    %v1588 = vunpack.c.l.b16 %v638
    %v1589 = vunpack.c.h.b16 %v638
    %v1590 = vunpack.c.l.b16 %v639
    %v1591 = vunpack.c.h.b16 %v639
    %v1592 = vunpack.c.l.b16 %v640
    %v1593 = vunpack.c.h.b16 %v640
    %v1594 = vunpack.c.l.b16 %v641
    %v1595 = vunpack.c.h.b16 %v641
    %v1596 = vunpack.c.l.b16 %v642
    %v1597 = vunpack.c.h.b16 %v642
    %v1598 = vunpack.c.l.b16 %v643
    %v1599 = vunpack.c.h.b16 %v643
    %v1600 = vunpack.c.l.b16 %v644
    %v1601 = vunpack.c.h.b16 %v644
    %v1602 = vunpack.c.l.b16 %v645
    %v1603 = vunpack.c.h.b16 %v645
    %v1604 = vunpack.c.l.b16 %v646
    %v1605 = vunpack.c.h.b16 %v646
    %v1606 = vunpack.c.l.b16 %v647
    %v1607 = vunpack.c.h.b16 %v647
    %v1608 = vunpack.c.l.b16 %v648
    %v1609 = vunpack.c.h.b16 %v648
    %v1610 = vunpack.c.l.b16 %v649
    %v1611 = vunpack.c.h.b16 %v649
    %v1612 = vunpack.c.l.b16 %v650
    %v1613 = vunpack.c.h.b16 %v650
    %v1614 = vunpack.c.l.b16 %v651
    %v1615 = vunpack.c.h.b16 %v651
    %v1616 = vunpack.c.l.b16 %v652
    %v1617 = vunpack.c.h.b16 %v652
    %v1618 = vunpack.c.l.b16 %v653
    %v1619 = vunpack.c.h.b16 %v653
    %v1620 = vunpack.c.l.b16 %v654
    %v1621 = vunpack.c.h.b16 %v654
    %v1622 = vunpack.c.l.b16 %v655
    %v1623 = vunpack.c.h.b16 %v655
    %v1624 = vunpack.c.l.b16 %v656
    %v1625 = vunpack.c.h.b16 %v656
    %v1626 = vunpack.c.l.b16 %v657
    %v1627 = vunpack.c.h.b16 %v657
    %v1628 = vunpack.c.l.b16 %v658
    %v1629 = vunpack.c.h.b16 %v658
    %v1630 = vunpack.c.l.b16 %v659
    %v1631 = vunpack.c.h.b16 %v659
    %v1632 = vunpack.c.l.b16 %v660
    %v1633 = vunpack.c.h.b16 %v660
    %v1634 = vunpack.c.l.b16 %v661
    %v1635 = vunpack.c.h.b16 %v661
    %v1636 = vunpack.c.l.b16 %v662
    %v1637 = vunpack.c.h.b16 %v662
    %v1638 = vunpack.c.l.b16 %v663
    %v1639 = vunpack.c.h.b16 %v663
    %v1640 = vunpack.c.l.b16 %v664
    %v1641 = vunpack.c.h.b16 %v664
    %v1642 = vunpack.c.l.b16 %v665
    %v1643 = vunpack.c.h.b16 %v665
    %v1644 = vunpack.c.l.b16 %v666
    %v1645 = vunpack.c.h.b16 %v666
    %v1646 = vunpack.c.l.b16 %v667
    %v1647 = vunpack.c.h.b16 %v667
    %v1648 = vunpack.c.l.b16 %v668
    %v1649 = vunpack.c.h.b16 %v668
    %v1650 = vunpack.c.l.b16 %v669
    %v1651 = vunpack.c.h.b16 %v669
    %v1652 = vunpack.c.l.b16 %v670
    %v1653 = vunpack.c.h.b16 %v670
    %v1654 = vunpack.c.l.b16 %v671
    %v1655 = vunpack.c.h.b16 %v671
    %v1656 = vunpack.c.l.b16 %v672
    %v1657 = vunpack.c.h.b16 %v672
    %v1658 = vunpack.c.l.b16 %v673
    %v1659 = vunpack.c.h.b16 %v673
    %v1660 = vunpack.c.l.b16 %v674
    %v1661 = vunpack.c.h.b16 %v674
    %v1662 = vunpack.c.l.b16 %v675
    %v1663 = vunpack.c.h.b16 %v675
    %v1664 = vunpack.c.l.b16 %v676
    %v1665 = vunpack.c.h.b16 %v676
    %v1666 = vunpack.c.l.b16 %v677
    %v1667 = vunpack.c.h.b16 %v677
    %v1668 = vunpack.c.l.b16 %v678
    %v1669 = vunpack.c.h.b16 %v678
    %v1670 = vunpack.c.l.b16 %v679
    %v1671 = vunpack.c.h.b16 %v679
    %v1672 = vunpack.c.l.b16 %v680
    %v1673 = vunpack.c.h.b16 %v680
    %v1674 = vunpack.c.l.b16 %v681
    %v1675 = vunpack.c.h.b16 %v681
    %v1676 = vunpack.c.l.b16 %v682
    %v1677 = vunpack.c.h.b16 %v682
    %v1678 = vunpack.c.l.b16 %v683
    %v1679 = vunpack.c.h.b16 %v683
    %v1680 = vunpack.c.l.b16 %v684
    %v1681 = vunpack.c.h.b16 %v684
    %v1682 = vunpack.c.l.b16 %v685
    %v1683 = vunpack.c.h.b16 %v685
    %v1684 = vunpack.c.l.b16 %v686
    %v1685 = vunpack.c.h.b16 %v686
    %v1686 = vunpack.c.l.b16 %v687
    %v1687 = vunpack.c.h.b16 %v687
    %v1688 = vunpack.c.l.b16 %v688
    %v1689 = vunpack.c.h.b16 %v688
    %v1690 = vunpack.c.l.b16 %v689
    %v1691 = vunpack.c.h.b16 %v689
    %v1692 = vunpack.c.l.b16 %v690
    %v1693 = vunpack.c.h.b16 %v690
    %v1694 = vunpack.c.l.b16 %v691
    %v1695 = vunpack.c.h.b16 %v691
    %v1696 = vunpack.c.l.b16 %v692
    %v1697 = vunpack.c.h.b16 %v692
    %v1698 = vunpack.c.l.b16 %v693
    %v1699 = vunpack.c.h.b16 %v693
    %v1700 = vunpack.c.l.b16 %v694
    %v1701 = vunpack.c.h.b16 %v694
    %v1702 = vunpack.c.l.b16 %v695
    %v1703 = vunpack.c.h.b16 %v695
    %v1704 = vunpack.c.l.b16 %v696
    %v1705 = vunpack.c.h.b16 %v696
    %v1706 = vunpack.c.l.b16 %v697
    %v1707 = vunpack.c.h.b16 %v697
    %v1708 = vunpack.c.l.b16 %v698
    %v1709 = vunpack.c.h.b16 %v698
    %v1710 = vunpack.c.l.b16 %v699
    %v1711 = vunpack.c.h.b16 %v699
    %v1712 = vunpack.c.l.b16 %v700
    %v1713 = vunpack.c.h.b16 %v700
    %v1714 = vunpack.c.l.b16 %v701
    %v1715 = vunpack.c.h.b16 %v701
    %v1716 = vunpack.c.l.b16 %v702
    %v1717 = vunpack.c.h.b16 %v702
    %v1718 = vunpack.c.l.b16 %v703
    %v1719 = vunpack.c.h.b16 %v703
    %v1720 = vunpack.c.l.b16 %v704
    %v1721 = vunpack.c.h.b16 %v704
    %v1722 = vunpack.c.l.b16 %v705
    %v1723 = vunpack.c.h.b16 %v705
    %v1724 = vunpack.c.l.b16 %v706
    %v1725 = vunpack.c.h.b16 %v706
    %v1726 = vunpack.c.l.b16 %v707
    %v1727 = vunpack.c.h.b16 %v707
    %v1728 = vunpack.c.l.b16 %v708
    %v1729 = vunpack.c.h.b16 %v708
    %v1730 = vunpack.c.l.b16 %v709
    %v1731 = vunpack.c.h.b16 %v709
    %v1732 = vunpack.c.l.b16 %v710
    %v1733 = vunpack.c.h.b16 %v710
    %v1734 = vunpack.c.l.b16 %v711
    %v1735 = vunpack.c.h.b16 %v711
    %v1736 = vunpack.c.l.b16 %v712
    %v1737 = vunpack.c.h.b16 %v712
    %v1738 = vunpack.c.l.b16 %v713
    %v1739 = vunpack.c.h.b16 %v713
    %v1740 = vunpack.c.l.b16 %v714
    %v1741 = vunpack.c.h.b16 %v714
    %v1742 = vunpack.c.l.b16 %v715
    %v1743 = vunpack.c.h.b16 %v715
    %v1744 = vunpack.c.l.b16 %v716
    %v1745 = vunpack.c.h.b16 %v716
    %v1746 = vunpack.c.l.b16 %v717
    %v1747 = vunpack.c.h.b16 %v717
    %v1748 = vunpack.c.l.b16 %v718
    %v1749 = vunpack.c.h.b16 %v718
    %v1750 = vunpack.c.l.b16 %v719
    %v1751 = vunpack.c.h.b16 %v719
    %v1752 = vunpack.c.l.b16 %v720
    %v1753 = vunpack.c.h.b16 %v720
    %v1754 = vunpack.c.l.b16 %v721
    %v1755 = vunpack.c.h.b16 %v721
    %v1756 = vunpack.c.l.b16 %v722
    %v1757 = vunpack.c.h.b16 %v722
    %v1758 = vunpack.c.l.b16 %v723
    %v1759 = vunpack.c.h.b16 %v723
    %v1760 = vunpack.c.l.b16 %v724
    %v1761 = vunpack.c.h.b16 %v724
    %v1762 = vunpack.c.l.b16 %v725
    %v1763 = vunpack.c.h.b16 %v725
    %v1764 = vunpack.c.l.b16 %v726
    %v1765 = vunpack.c.h.b16 %v726
    %v1766 = vunpack.c.l.b16 %v727
    %v1767 = vunpack.c.h.b16 %v727
    %v1768 = vpack.c.b16 %v1102, %v1096
    %v1769 = vpack.c.b16 %v1103, %v1097
    %v1770 = vpack.c.b16 %v1104, %v1098
    %v1771 = vpack.c.b16 %v1105, %v1099
    %v1772 = vpack.c.b16 %v1106, %v1100
    %v1773 = vpack.c.b16 %v1107, %v1101
    %v1774 = vpack.c.b16 %v1114, %v1108
    %v1775 = vpack.c.b16 %v1115, %v1109
    %v1776 = vpack.c.b16 %v1116, %v1110
    %v1777 = vpack.c.b16 %v1117, %v1111
    %v1778 = vpack.c.b16 %v1118, %v1112
    %v1779 = vpack.c.b16 %v1119, %v1113
    %v1780 = vpack.c.b16 %v1126, %v1120
    %v1781 = vpack.c.b16 %v1127, %v1121
    %v1782 = vpack.c.b16 %v1128, %v1122
    %v1783 = vpack.c.b16 %v1129, %v1123
    %v1784 = vpack.c.b16 %v1130, %v1124
    %v1785 = vpack.c.b16 %v1131, %v1125
    %v1786 = vpack.c.b16 %v1138, %v1132
    %v1787 = vpack.c.b16 %v1139, %v1133
    %v1788 = vpack.c.b16 %v1140, %v1134
    %v1789 = vpack.c.b16 %v1141, %v1135
    %v1790 = vpack.c.b16 %v1142, %v1136
    %v1791 = vpack.c.b16 %v1143, %v1137
    %v1792 = vpack.c.b16 %v1150, %v1144
    %v1793 = vpack.c.b16 %v1151, %v1145
    %v1794 = vpack.c.b16 %v1152, %v1146
    %v1795 = vpack.c.b16 %v1153, %v1147
    %v1796 = vpack.c.b16 %v1154, %v1148
    %v1797 = vpack.c.b16 %v1155, %v1149
    %v1798 = vpack.c.b16 %v1162, %v1156
    %v1799 = vpack.c.b16 %v1163, %v1157
    %v1800 = vpack.c.b16 %v1164, %v1158
    %v1801 = vpack.c.b16 %v1165, %v1159
    %v1802 = vpack.c.b16 %v1166, %v1160
    %v1803 = vpack.c.b16 %v1167, %v1161
    %v1804 = vpack.c.b16 %v1174, %v1168
    %v1805 = vpack.c.b16 %v1175, %v1169
    %v1806 = vpack.c.b16 %v1176, %v1170
    %v1807 = vpack.c.b16 %v1177, %v1171
    %v1808 = vpack.c.b16 %v1178, %v1172
    %v1809 = vpack.c.b16 %v1179, %v1173
    %v1810 = vpack.c.b16 %v1186, %v1180
    %v1811 = vpack.c.b16 %v1187, %v1181
    %v1812 = vpack.c.b16 %v1188, %v1182
    %v1813 = vpack.c.b16 %v1189, %v1183
    %v1814 = vpack.c.b16 %v1190, %v1184
    %v1815 = vpack.c.b16 %v1191, %v1185
    %v1816 = vpack.c.b16 %v1198, %v1192
    %v1817 = vpack.c.b16 %v1199, %v1193
    %v1818 = vpack.c.b16 %v1200, %v1194
    %v1819 = vpack.c.b16 %v1201, %v1195
    %v1820 = vpack.c.b16 %v1202, %v1196
    %v1821 = vpack.c.b16 %v1203, %v1197
    %v1822 = vpack.c.b16 %v1210, %v1204
    %v1823 = vpack.c.b16 %v1211, %v1205
    %v1824 = vpack.c.b16 %v1212, %v1206
    %v1825 = vpack.c.b16 %v1213, %v1207
    %v1826 = vpack.c.b16 %v1214, %v1208
    %v1827 = vpack.c.b16 %v1215, %v1209
    %v1828 = vpack.c.b16 %v1222, %v1216
    %v1829 = vpack.c.b16 %v1223, %v1217
    %v1830 = vpack.c.b16 %v1224, %v1218
    %v1831 = vpack.c.b16 %v1225, %v1219
    %v1832 = vpack.c.b16 %v1226, %v1220
    %v1833 = vpack.c.b16 %v1227, %v1221
    %v1834 = vpack.c.b16 %v1234, %v1228
    %v1835 = vpack.c.b16 %v1235, %v1229
    %v1836 = vpack.c.b16 %v1236, %v1230
    %v1837 = vpack.c.b16 %v1237, %v1231
    %v1838 = vpack.c.b16 %v1238, %v1232
    %v1839 = vpack.c.b16 %v1239, %v1233
    %v1840 = vpack.c.b16 %v1246, %v1240
    %v1841 = vpack.c.b16 %v1247, %v1241
    %v1842 = vpack.c.b16 %v1248, %v1242
    %v1843 = vpack.c.b16 %v1249, %v1243
    %v1844 = vpack.c.b16 %v1250, %v1244
    %v1845 = vpack.c.b16 %v1251, %v1245
    %v1846 = vpack.c.b16 %v1258, %v1252
    %v1847 = vpack.c.b16 %v1259, %v1253
    %v1848 = vpack.c.b16 %v1260, %v1254
    %v1849 = vpack.c.b16 %v1261, %v1255
    %v1850 = vpack.c.b16 %v1262, %v1256
    %v1851 = vpack.c.b16 %v1263, %v1257
    %v1852 = vpack.c.b16 %v1270, %v1264
    %v1853 = vpack.c.b16 %v1271, %v1265
    %v1854 = vpack.c.b16 %v1272, %v1266
    %v1855 = vpack.c.b16 %v1273, %v1267
    %v1856 = vpack.c.b16 %v1274, %v1268
    %v1857 = vpack.c.b16 %v1275, %v1269
    %v1858 = vpack.c.b16 %v1282, %v1276
    %v1859 = vpack.c.b16 %v1283, %v1277
    %v1860 = vpack.c.b16 %v1284, %v1278
    %v1861 = vpack.c.b16 %v1285, %v1279
    %v1862 = vpack.c.b16 %v1286, %v1280
    %v1863 = vpack.c.b16 %v1287, %v1281
    %v1864 = vpack.c.b16 %v1294, %v1288
    %v1865 = vpack.c.b16 %v1295, %v1289
    %v1866 = vpack.c.b16 %v1296, %v1290
    %v1867 = vpack.c.b16 %v1297, %v1291
    %v1868 = vpack.c.b16 %v1298, %v1292
    %v1869 = vpack.c.b16 %v1299, %v1293
    %v1870 = vpack.c.b16 %v1306, %v1300
    %v1871 = vpack.c.b16 %v1307, %v1301
    %v1872 = vpack.c.b16 %v1308, %v1302
    %v1873 = vpack.c.b16 %v1309, %v1303
    %v1874 = vpack.c.b16 %v1310, %v1304
    %v1875 = vpack.c.b16 %v1311, %v1305
    %v1876 = vpack.c.b16 %v1318, %v1312
    %v1877 = vpack.c.b16 %v1319, %v1313
    %v1878 = vpack.c.b16 %v1320, %v1314
    %v1879 = vpack.c.b16 %v1321, %v1315
    %v1880 = vpack.c.b16 %v1322, %v1316
    %v1881 = vpack.c.b16 %v1323, %v1317
    %v1882 = vpack.c.b16 %v1330, %v1324
    %v1883 = vpack.c.b16 %v1331, %v1325
    %v1884 = vpack.c.b16 %v1332, %v1326
    %v1885 = vpack.c.b16 %v1333, %v1327
    %v1886 = vpack.c.b16 %v1334, %v1328
    %v1887 = vpack.c.b16 %v1335, %v1329
    %v1888 = vpack.c.b16 %v1342, %v1336
    %v1889 = vpack.c.b16 %v1343, %v1337
    %v1890 = vpack.c.b16 %v1344, %v1338
    %v1891 = vpack.c.b16 %v1345, %v1339
    %v1892 = vpack.c.b16 %v1346, %v1340
    %v1893 = vpack.c.b16 %v1347, %v1341
    %v1894 = vpack.c.b16 %v1354, %v1348
    %v1895 = vpack.c.b16 %v1355, %v1349
    %v1896 = vpack.c.b16 %v1356, %v1350
    %v1897 = vpack.c.b16 %v1357, %v1351
    %v1898 = vpack.c.b16 %v1358, %v1352
    %v1899 = vpack.c.b16 %v1359, %v1353
    %v1900 = vpack.c.b16 %v1366, %v1360
    %v1901 = vpack.c.b16 %v1367, %v1361
    %v1902 = vpack.c.b16 %v1368, %v1362
    %v1903 = vpack.c.b16 %v1369, %v1363
    %v1904 = vpack.c.b16 %v1370, %v1364
    %v1905 = vpack.c.b16 %v1371, %v1365
    %v1906 = vpack.c.b16 %v1378, %v1372
    %v1907 = vpack.c.b16 %v1379, %v1373
    %v1908 = vpack.c.b16 %v1380, %v1374
    %v1909 = vpack.c.b16 %v1381, %v1375
    %v1910 = vpack.c.b16 %v1382, %v1376
    %v1911 = vpack.c.b16 %v1383, %v1377
    %v1912 = vpack.c.b16 %v1390, %v1384
    %v1913 = vpack.c.b16 %v1391, %v1385
    %v1914 = vpack.c.b16 %v1392, %v1386
    %v1915 = vpack.c.b16 %v1393, %v1387
    %v1916 = vpack.c.b16 %v1394, %v1388
    %v1917 = vpack.c.b16 %v1395, %v1389
    %v1918 = vpack.c.b16 %v1402, %v1396
    %v1919 = vpack.c.b16 %v1403, %v1397
    %v1920 = vpack.c.b16 %v1404, %v1398
    %v1921 = vpack.c.b16 %v1405, %v1399
    %v1922 = vpack.c.b16 %v1406, %v1400
    %v1923 = vpack.c.b16 %v1407, %v1401
    %v1924 = vpack.c.b16 %v1414, %v1408
    %v1925 = vpack.c.b16 %v1415, %v1409
    %v1926 = vpack.c.b16 %v1416, %v1410
    %v1927 = vpack.c.b16 %v1417, %v1411
    %v1928 = vpack.c.b16 %v1418, %v1412
    %v1929 = vpack.c.b16 %v1419, %v1413
    %v1930 = vpack.c.b16 %v1426, %v1420
    %v1931 = vpack.c.b16 %v1427, %v1421
    %v1932 = vpack.c.b16 %v1428, %v1422
    %v1933 = vpack.c.b16 %v1429, %v1423
    %v1934 = vpack.c.b16 %v1430, %v1424
    %v1935 = vpack.c.b16 %v1431, %v1425
    %v1936 = vpack.c.b16 %v1438, %v1432
    %v1937 = vpack.c.b16 %v1439, %v1433
    %v1938 = vpack.c.b16 %v1440, %v1434
    %v1939 = vpack.c.b16 %v1441, %v1435
    %v1940 = vpack.c.b16 %v1442, %v1436
    %v1941 = vpack.c.b16 %v1443, %v1437
    %v1942 = vpack.c.b16 %v1450, %v1444
    %v1943 = vpack.c.b16 %v1451, %v1445
    %v1944 = vpack.c.b16 %v1452, %v1446
    %v1945 = vpack.c.b16 %v1453, %v1447
    %v1946 = vpack.c.b16 %v1454, %v1448
    %v1947 = vpack.c.b16 %v1455, %v1449
    %v1948 = vpack.c.b16 %v1462, %v1456
    %v1949 = vpack.c.b16 %v1463, %v1457
    %v1950 = vpack.c.b16 %v1464, %v1458
    %v1951 = vpack.c.b16 %v1465, %v1459
    %v1952 = vpack.c.b16 %v1466, %v1460
    %v1953 = vpack.c.b16 %v1467, %v1461
    %v1954 = vpack.c.b16 %v1474, %v1468
    %v1955 = vpack.c.b16 %v1475, %v1469
    %v1956 = vpack.c.b16 %v1476, %v1470
    %v1957 = vpack.c.b16 %v1477, %v1471
    %v1958 = vpack.c.b16 %v1478, %v1472
    %v1959 = vpack.c.b16 %v1479, %v1473
    %v1960 = vpack.c.b16 %v1486, %v1480
    %v1961 = vpack.c.b16 %v1487, %v1481
    %v1962 = vpack.c.b16 %v1488, %v1482
    %v1963 = vpack.c.b16 %v1489, %v1483
    %v1964 = vpack.c.b16 %v1490, %v1484
    %v1965 = vpack.c.b16 %v1491, %v1485
    %v1966 = vpack.c.b16 %v1498, %v1492
    %v1967 = vpack.c.b16 %v1499, %v1493
    %v1968 = vpack.c.b16 %v1500, %v1494
    %v1969 = vpack.c.b16 %v1501, %v1495
    %v1970 = vpack.c.b16 %v1502, %v1496
    %v1971 = vpack.c.b16 %v1503, %v1497
    %v1972 = vpack.c.b16 %v1510, %v1504
    %v1973 = vpack.c.b16 %v1511, %v1505
    %v1974 = vpack.c.b16 %v1512, %v1506
    %v1975 = vpack.c.b16 %v1513, %v1507
    %v1976 = vpack.c.b16 %v1514, %v1508
    %v1977 = vpack.c.b16 %v1515, %v1509
    %v1978 = vpack.c.b16 %v1522, %v1516
    %v1979 = vpack.c.b16 %v1523, %v1517
    %v1980 = vpack.c.b16 %v1524, %v1518
    %v1981 = vpack.c.b16 %v1525, %v1519
    %v1982 = vpack.c.b16 %v1526, %v1520
    %v1983 = vpack.c.b16 %v1527, %v1521
    %v1984 = vpack.c.b16 %v1534, %v1528
    %v1985 = vpack.c.b16 %v1535, %v1529
    %v1986 = vpack.c.b16 %v1536, %v1530
    %v1987 = vpack.c.b16 %v1537, %v1531
    %v1988 = vpack.c.b16 %v1538, %v1532
    %v1989 = vpack.c.b16 %v1539, %v1533
    %v1990 = vpack.c.b16 %v1546, %v1540
    %v1991 = vpack.c.b16 %v1547, %v1541
    %v1992 = vpack.c.b16 %v1548, %v1542
    %v1993 = vpack.c.b16 %v1549, %v1543
    %v1994 = vpack.c.b16 %v1550, %v1544
    %v1995 = vpack.c.b16 %v1551, %v1545
    %v1996 = vpack.c.b16 %v1558, %v1552
    %v1997 = vpack.c.b16 %v1559, %v1553
    %v1998 = vpack.c.b16 %v1560, %v1554
    %v1999 = vpack.c.b16 %v1561, %v1555
    %v2000 = vpack.c.b16 %v1562, %v1556
    %v2001 = vpack.c.b16 %v1563, %v1557
    %v2002 = vpack.c.b16 %v1570, %v1564
    %v2003 = vpack.c.b16 %v1571, %v1565
    %v2004 = vpack.c.b16 %v1572, %v1566
    %v2005 = vpack.c.b16 %v1573, %v1567
    %v2006 = vpack.c.b16 %v1574, %v1568
    %v2007 = vpack.c.b16 %v1575, %v1569
    %v2008 = vpack.c.b16 %v1582, %v1576
    %v2009 = vpack.c.b16 %v1583, %v1577
    %v2010 = vpack.c.b16 %v1584, %v1578
    %v2011 = vpack.c.b16 %v1585, %v1579
    %v2012 = vpack.c.b16 %v1586, %v1580
    %v2013 = vpack.c.b16 %v1587, %v1581
    %v2014 = vpack.c.b16 %v1594, %v1588
    %v2015 = vpack.c.b16 %v1595, %v1589
    %v2016 = vpack.c.b16 %v1596, %v1590
    %v2017 = vpack.c.b16 %v1597, %v1591
    %v2018 = vpack.c.b16 %v1598, %v1592
    %v2019 = vpack.c.b16 %v1599, %v1593
    %v2020 = vpack.c.b16 %v1606, %v1600
    %v2021 = vpack.c.b16 %v1607, %v1601
    %v2022 = vpack.c.b16 %v1608, %v1602
    %v2023 = vpack.c.b16 %v1609, %v1603
    %v2024 = vpack.c.b16 %v1610, %v1604
    %v2025 = vpack.c.b16 %v1611, %v1605
    %v2026 = vpack.c.b16 %v1618, %v1612
    %v2027 = vpack.c.b16 %v1619, %v1613
    %v2028 = vpack.c.b16 %v1620, %v1614
    %v2029 = vpack.c.b16 %v1621, %v1615
    %v2030 = vpack.c.b16 %v1622, %v1616
    %v2031 = vpack.c.b16 %v1623, %v1617
    %v2032 = vpack.c.b16 %v1630, %v1624
    %v2033 = vpack.c.b16 %v1631, %v1625
    %v2034 = vpack.c.b16 %v1632, %v1626
    %v2035 = vpack.c.b16 %v1633, %v1627
    %v2036 = vpack.c.b16 %v1634, %v1628
    %v2037 = vpack.c.b16 %v1635, %v1629
    %v2038 = vpack.c.b16 %v1642, %v1636
    %v2039 = vpack.c.b16 %v1643, %v1637
    %v2040 = vpack.c.b16 %v1644, %v1638
    %v2041 = vpack.c.b16 %v1645, %v1639
    %v2042 = vpack.c.b16 %v1646, %v1640
    %v2043 = vpack.c.b16 %v1647, %v1641
    %v2044 = vpack.c.b16 %v1654, %v1648
    %v2045 = vpack.c.b16 %v1655, %v1649
    %v2046 = vpack.c.b16 %v1656, %v1650
    %v2047 = vpack.c.b16 %v1657, %v1651
    %v2048 = vpack.c.b16 %v1658, %v1652
    %v2049 = vpack.c.b16 %v1659, %v1653
    %v2050 = vpack.c.b16 %v1666, %v1660
    %v2051 = vpack.c.b16 %v1667, %v1661
    %v2052 = vpack.c.b16 %v1668, %v1662
    %v2053 = vpack.c.b16 %v1669, %v1663
    %v2054 = vpack.c.b16 %v1670, %v1664
    %v2055 = vpack.c.b16 %v1671, %v1665
    %v2056 = vpack.c.b16 %v1678, %v1672
    %v2057 = vpack.c.b16 %v1679, %v1673
    %v2058 = vpack.c.b16 %v1680, %v1674
    %v2059 = vpack.c.b16 %v1681, %v1675
    %v2060 = vpack.c.b16 %v1682, %v1676
    %v2061 = vpack.c.b16 %v1683, %v1677
    %v2062 = vpack.c.b16 %v1690, %v1684
    %v2063 = vpack.c.b16 %v1691, %v1685
    %v2064 = vpack.c.b16 %v1692, %v1686
    %v2065 = vpack.c.b16 %v1693, %v1687
    %v2066 = vpack.c.b16 %v1694, %v1688
    %v2067 = vpack.c.b16 %v1695, %v1689
    %v2068 = vpack.c.b16 %v1702, %v1696
    %v2069 = vpack.c.b16 %v1703, %v1697
    %v2070 = vpack.c.b16 %v1704, %v1698
    %v2071 = vpack.c.b16 %v1705, %v1699
    %v2072 = vpack.c.b16 %v1706, %v1700
    %v2073 = vpack.c.b16 %v1707, %v1701
    %v2074 = vpack.c.b16 %v1714, %v1708
    %v2075 = vpack.c.b16 %v1715, %v1709
    %v2076 = vpack.c.b16 %v1716, %v1710
    %v2077 = vpack.c.b16 %v1717, %v1711
    %v2078 = vpack.c.b16 %v1718, %v1712
    %v2079 = vpack.c.b16 %v1719, %v1713
    %v2080 = vpack.c.b16 %v1726, %v1720
    %v2081 = vpack.c.b16 %v1727, %v1721
    %v2082 = vpack.c.b16 %v1728, %v1722
    %v2083 = vpack.c.b16 %v1729, %v1723
    %v2084 = vpack.c.b16 %v1730, %v1724
    %v2085 = vpack.c.b16 %v1731, %v1725
    %v2086 = vpack.c.b16 %v1738, %v1732
    %v2087 = vpack.c.b16 %v1739, %v1733
    %v2088 = vpack.c.b16 %v1740, %v1734
    %v2089 = vpack.c.b16 %v1741, %v1735
    %v2090 = vpack.c.b16 %v1742, %v1736
    %v2091 = vpack.c.b16 %v1743, %v1737
    %v2092 = vpack.c.b16 %v1750, %v1744
    %v2093 = vpack.c.b16 %v1751, %v1745
    %v2094 = vpack.c.b16 %v1752, %v1746
    %v2095 = vpack.c.b16 %v1753, %v1747
    %v2096 = vpack.c.b16 %v1754, %v1748
    %v2097 = vpack.c.b16 %v1755, %v1749
    %v2098 = vpack.c.b16 %v1762, %v1756
    %v2099 = vpack.c.b16 %v1763, %v1757
    %v2100 = vpack.c.b16 %v1764, %v1758
    %v2101 = vpack.c.b16 %v1765, %v1759
    %v2102 = vpack.c.b16 %v1766, %v1760
    %v2103 = vpack.c.b16 %v1767, %v1761
    %2440 = vmatprep.subr.bf16.mxu0 %v1811
    %2441 = vmatpush1.bf16.msra.mxu0 %v1810
    %2442 = vmatprep.subr.bf16.mxu0 %v1805
    %2443 = vmatpush1.bf16.msra.mxu0 %v1804
    %2444 = vmatprep.subr.bf16.mxu0 %v1799
    %2445 = vmatpush1.bf16.msra.mxu0 %v1798
    %2446 = vmatprep.subr.bf16.mxu0 %v1793
    %2447 = vmatpush1.bf16.msra.mxu0 %v1792
    %2448 = vmatprep.subr.bf16.mxu0 %v1787
    %2449 = vmatpush1.bf16.msra.mxu0 %v1786
    %2450 = vmatprep.subr.bf16.mxu0 %v1781
    %2451 = vmatpush1.bf16.msra.mxu0 %v1780
    %2452 = vmatprep.subr.bf16.mxu0 %v1775
    %2453 = vmatpush1.bf16.msra.mxu0 %v1774
    %2454 = vmatprep.subr.bf16.mxu0 %v1769
    %2455 = vmatpush1.bf16.msra.mxu0 %v1768
    %2456 = vmatprep.subr.bf16.mxu0 %v1859
    %2457 = vmatpush2.bf16.msra.mxu0 %v1858
    %2458 = vmatprep.subr.bf16.mxu0 %v1853
    %2459 = vmatpush2.bf16.msra.mxu0 %v1852
    %2460 = vmatprep.subr.bf16.mxu0 %v1847
    %2461 = vmatpush2.bf16.msra.mxu0 %v1846
    %2462 = vmatprep.subr.bf16.mxu0 %v1841
    %2463 = vmatpush2.bf16.msra.mxu0 %v1840
    %2464 = vmatprep.subr.bf16.mxu0 %v1835
    %2465 = vmatpush2.bf16.msra.mxu0 %v1834
    %2466 = vmatprep.subr.bf16.mxu0 %v1829
    %2467 = vmatpush2.bf16.msra.mxu0 %v1828
    %2468 = vmatprep.subr.bf16.mxu0 %v1823
    %2469 = vmatpush2.bf16.msra.mxu0 %v1822
    %2470 = vmatprep.subr.bf16.mxu0 %v1817
    %2471 = vmatpush2.bf16.msra.mxu0 %v1816
    %2472 = vmatprep.mubr.bf16.mxu0 %v386
    %2473 = vmatmul.mubr.bf16.gmra.mxu0 %v385
    %v2474 = vpop.f32.mrf.mxu0
    %v2475 = vadd.f32 %v733, %v2474
    %v2476 = vpop.f32.mrf.mxu0
    %v2477 = vadd.f32 %v737, %v2476
    %v2478 = vpop.f32.mrf.mxu0
    %v2479 = vpop.f32.mrf.mxu0
    %2480 = vdwg.mxu0
    %2481 = vmatprep.subr.bf16.mxu0 %v1907
    %2482 = vmatpush1.bf16.msra.mxu0 %v1906
    %2483 = vmatprep.subr.bf16.mxu0 %v1901
    %2484 = vmatpush1.bf16.msra.mxu0 %v1900
    %2485 = vmatprep.subr.bf16.mxu0 %v1895
    %2486 = vmatpush1.bf16.msra.mxu0 %v1894
    %2487 = vmatprep.subr.bf16.mxu0 %v1889
    %2488 = vmatpush1.bf16.msra.mxu0 %v1888
    %2489 = vmatprep.subr.bf16.mxu0 %v1883
    %2490 = vmatpush1.bf16.msra.mxu0 %v1882
    %2491 = vmatprep.subr.bf16.mxu0 %v1877
    %2492 = vmatpush1.bf16.msra.mxu0 %v1876
    %2493 = vmatprep.subr.bf16.mxu0 %v1871
    %2494 = vmatpush1.bf16.msra.mxu0 %v1870
    %2495 = vmatprep.subr.bf16.mxu0 %v1865
    %2496 = vmatpush1.bf16.msra.mxu0 %v1864
    %2497 = vmatprep.subr.bf16.mxu0 %v1955
    %2498 = vmatpush2.bf16.msra.mxu0 %v1954
    %2499 = vmatprep.subr.bf16.mxu0 %v1949
    %2500 = vmatpush2.bf16.msra.mxu0 %v1948
    %2501 = vmatprep.subr.bf16.mxu0 %v1943
    %2502 = vmatpush2.bf16.msra.mxu0 %v1942
    %2503 = vmatprep.subr.bf16.mxu0 %v1937
    %2504 = vmatpush2.bf16.msra.mxu0 %v1936
    %2505 = vmatprep.subr.bf16.mxu0 %v1931
    %2506 = vmatpush2.bf16.msra.mxu0 %v1930
    %2507 = vmatprep.subr.bf16.mxu0 %v1925
    %2508 = vmatpush2.bf16.msra.mxu0 %v1924
    %2509 = vmatprep.subr.bf16.mxu0 %v1919
    %2510 = vmatpush2.bf16.msra.mxu0 %v1918
    %2511 = vmatprep.subr.bf16.mxu0 %v1913
    %2512 = vmatpush2.bf16.msra.mxu0 %v1912
    %2513 = vmatprep.mubr.bf16.mxu0 %v388
    %2514 = vmatmul.mubr.bf16.gmra.mxu0 %v387
    %v2515 = vpop.f32.mrf.mxu0
    %v2516 = vadd.f32 %v2475, %v2515
    %v2517 = vpop.f32.mrf.mxu0
    %v2518 = vadd.f32 %v2477, %v2517
    %v2519 = vpop.f32.mrf.mxu0
    %v2520 = vpop.f32.mrf.mxu0
    %2521 = vdwg.mxu0
    %2522 = vmatprep.subr.bf16.mxu0 %v2003
    %2523 = vmatpush1.bf16.msra.mxu0 %v2002
    %2524 = vmatprep.subr.bf16.mxu0 %v1997
    %2525 = vmatpush1.bf16.msra.mxu0 %v1996
    %2526 = vmatprep.subr.bf16.mxu0 %v1991
    %2527 = vmatpush1.bf16.msra.mxu0 %v1990
    %2528 = vmatprep.subr.bf16.mxu0 %v1985
    %2529 = vmatpush1.bf16.msra.mxu0 %v1984
    %2530 = vmatprep.subr.bf16.mxu0 %v1979
    %2531 = vmatpush1.bf16.msra.mxu0 %v1978
    %2532 = vmatprep.subr.bf16.mxu0 %v1973
    %2533 = vmatpush1.bf16.msra.mxu0 %v1972
    %2534 = vmatprep.subr.bf16.mxu0 %v1967
    %2535 = vmatpush1.bf16.msra.mxu0 %v1966
    %2536 = vmatprep.subr.bf16.mxu0 %v1961
    %2537 = vmatpush1.bf16.msra.mxu0 %v1960
    %2538 = vmatprep.subr.bf16.mxu0 %v2051
    %2539 = vmatpush2.bf16.msra.mxu0 %v2050
    %2540 = vmatprep.subr.bf16.mxu0 %v2045
    %2541 = vmatpush2.bf16.msra.mxu0 %v2044
    %2542 = vmatprep.subr.bf16.mxu0 %v2039
    %2543 = vmatpush2.bf16.msra.mxu0 %v2038
    %2544 = vmatprep.subr.bf16.mxu0 %v2033
    %2545 = vmatpush2.bf16.msra.mxu0 %v2032
    %2546 = vmatprep.subr.bf16.mxu0 %v2027
    %2547 = vmatpush2.bf16.msra.mxu0 %v2026
    %2548 = vmatprep.subr.bf16.mxu0 %v2021
    %2549 = vmatpush2.bf16.msra.mxu0 %v2020
    %2550 = vmatprep.subr.bf16.mxu0 %v2015
    %2551 = vmatpush2.bf16.msra.mxu0 %v2014
    %2552 = vmatprep.subr.bf16.mxu0 %v2009
    %2553 = vmatpush2.bf16.msra.mxu0 %v2008
    %2554 = vmatprep.mubr.bf16.mxu0 %v390
    %2555 = vmatmul.mubr.bf16.gmra.mxu0 %v389
    %v2556 = vpop.f32.mrf.mxu0
    %v2557 = vadd.f32 %v2516, %v2556
    %v2558 = vpop.f32.mrf.mxu0
    %v2559 = vadd.f32 %v2518, %v2558
    %v2560 = vpop.f32.mrf.mxu0
    %v2561 = vpop.f32.mrf.mxu0
    %2562 = vdwg.mxu0
    %2563 = vmatprep.subr.bf16.mxu0 %v2099
    %2564 = vmatpush1.bf16.msra.mxu0 %v2098
    %2565 = vmatprep.subr.bf16.mxu0 %v2093
    %2566 = vmatpush1.bf16.msra.mxu0 %v2092
    %2567 = vmatprep.subr.bf16.mxu0 %v2087
    %2568 = vmatpush1.bf16.msra.mxu0 %v2086
    %2569 = vmatprep.subr.bf16.mxu0 %v2081
    %2570 = vmatpush1.bf16.msra.mxu0 %v2080
    %2571 = vmatprep.subr.bf16.mxu0 %v2075
    %2572 = vmatpush1.bf16.msra.mxu0 %v2074
    %2573 = vmatprep.subr.bf16.mxu0 %v2069
    %2574 = vmatpush1.bf16.msra.mxu0 %v2068
    %2575 = vmatprep.subr.bf16.mxu0 %v2063
    %2576 = vmatpush1.bf16.msra.mxu0 %v2062
    %2577 = vmatprep.subr.bf16.mxu0 %v2057
    %2578 = vmatpush1.bf16.msra.mxu0 %v2056
    %2579 = vmatprep.subr.bf16.mxu0 0
    %2580 = vmatpush2.bf16.msra.mxu0 0
    %2581 = vmatprep.subr.bf16.mxu0 0
    %2582 = vmatpush2.bf16.msra.mxu0 0
    %2583 = vmatprep.subr.bf16.mxu0 0
    %2584 = vmatpush2.bf16.msra.mxu0 0
    %2585 = vmatprep.subr.bf16.mxu0 0
    %2586 = vmatpush2.bf16.msra.mxu0 0
    %2587 = vmatprep.subr.bf16.mxu0 0
    %2588 = vmatpush2.bf16.msra.mxu0 0
    %2589 = vmatprep.subr.bf16.mxu0 0
    %2590 = vmatpush2.bf16.msra.mxu0 0
    %2591 = vmatprep.subr.bf16.mxu0 0
    %2592 = vmatpush2.bf16.msra.mxu0 0
    %2593 = vmatprep.subr.bf16.mxu0 0
    %2594 = vmatpush2.bf16.msra.mxu0 0
    %2595 = vmatprep.mubr.bf16.mxu0 0
    %2596 = vmatmul.mubr.bf16.gmra.mxu0 %v391
    %v2597 = vpop.f32.mrf.mxu0
    %v2598 = vadd.f32 %v2557, %v2597
    %v2599 = vpop.f32.mrf.mxu0
    %v2600 = vadd.f32 %v2559, %v2599
    %v2601 = vpop.f32.mrf.mxu0
    %v2602 = vpop.f32.mrf.mxu0
    %2603 = vdwg.mxu0
    %2604 = vmatprep.subr.bf16.mxu0 %v1813
    %2605 = vmatpush1.bf16.msra.mxu0 %v1812
    %2606 = vmatprep.subr.bf16.mxu0 %v1807
    %2607 = vmatpush1.bf16.msra.mxu0 %v1806
    %2608 = vmatprep.subr.bf16.mxu0 %v1801
    %2609 = vmatpush1.bf16.msra.mxu0 %v1800
    %2610 = vmatprep.subr.bf16.mxu0 %v1795
    %2611 = vmatpush1.bf16.msra.mxu0 %v1794
    %2612 = vmatprep.subr.bf16.mxu0 %v1789
    %2613 = vmatpush1.bf16.msra.mxu0 %v1788
    %2614 = vmatprep.subr.bf16.mxu0 %v1783
    %2615 = vmatpush1.bf16.msra.mxu0 %v1782
    %2616 = vmatprep.subr.bf16.mxu0 %v1777
    %2617 = vmatpush1.bf16.msra.mxu0 %v1776
    %2618 = vmatprep.subr.bf16.mxu0 %v1771
    %2619 = vmatpush1.bf16.msra.mxu0 %v1770
    %2620 = vmatprep.subr.bf16.mxu0 %v1861
    %2621 = vmatpush2.bf16.msra.mxu0 %v1860
    %2622 = vmatprep.subr.bf16.mxu0 %v1855
    %2623 = vmatpush2.bf16.msra.mxu0 %v1854
    %2624 = vmatprep.subr.bf16.mxu0 %v1849
    %2625 = vmatpush2.bf16.msra.mxu0 %v1848
    %2626 = vmatprep.subr.bf16.mxu0 %v1843
    %2627 = vmatpush2.bf16.msra.mxu0 %v1842
    %2628 = vmatprep.subr.bf16.mxu0 %v1837
    %2629 = vmatpush2.bf16.msra.mxu0 %v1836
    %2630 = vmatprep.subr.bf16.mxu0 %v1831
    %2631 = vmatpush2.bf16.msra.mxu0 %v1830
    %2632 = vmatprep.subr.bf16.mxu0 %v1825
    %2633 = vmatpush2.bf16.msra.mxu0 %v1824
    %2634 = vmatprep.subr.bf16.mxu0 %v1819
    %2635 = vmatpush2.bf16.msra.mxu0 %v1818
    %2636 = vmatprep.mubr.bf16.mxu0 %v386
    %2637 = vmatmul.mubr.bf16.gmra.mxu0 %v385
    %v2638 = vpop.f32.mrf.mxu0
    %v2639 = vadd.f32 %v741, %v2638
    %v2640 = vpop.f32.mrf.mxu0
    %v2641 = vadd.f32 %v745, %v2640
    %v2642 = vpop.f32.mrf.mxu0
    %v2643 = vpop.f32.mrf.mxu0
    %2644 = vdwg.mxu0
    %2645 = vmatprep.subr.bf16.mxu0 %v1909
    %2646 = vmatpush1.bf16.msra.mxu0 %v1908
    %2647 = vmatprep.subr.bf16.mxu0 %v1903
    %2648 = vmatpush1.bf16.msra.mxu0 %v1902
    %2649 = vmatprep.subr.bf16.mxu0 %v1897
    %2650 = vmatpush1.bf16.msra.mxu0 %v1896
    %2651 = vmatprep.subr.bf16.mxu0 %v1891
    %2652 = vmatpush1.bf16.msra.mxu0 %v1890
    %2653 = vmatprep.subr.bf16.mxu0 %v1885
    %2654 = vmatpush1.bf16.msra.mxu0 %v1884
    %2655 = vmatprep.subr.bf16.mxu0 %v1879
    %2656 = vmatpush1.bf16.msra.mxu0 %v1878
    %2657 = vmatprep.subr.bf16.mxu0 %v1873
    %2658 = vmatpush1.bf16.msra.mxu0 %v1872
    %2659 = vmatprep.subr.bf16.mxu0 %v1867
    %2660 = vmatpush1.bf16.msra.mxu0 %v1866
    %2661 = vmatprep.subr.bf16.mxu0 %v1957
    %2662 = vmatpush2.bf16.msra.mxu0 %v1956
    %2663 = vmatprep.subr.bf16.mxu0 %v1951
    %2664 = vmatpush2.bf16.msra.mxu0 %v1950
    %2665 = vmatprep.subr.bf16.mxu0 %v1945
    %2666 = vmatpush2.bf16.msra.mxu0 %v1944
    %2667 = vmatprep.subr.bf16.mxu0 %v1939
    %2668 = vmatpush2.bf16.msra.mxu0 %v1938
    %2669 = vmatprep.subr.bf16.mxu0 %v1933
    %2670 = vmatpush2.bf16.msra.mxu0 %v1932
    %2671 = vmatprep.subr.bf16.mxu0 %v1927
    %2672 = vmatpush2.bf16.msra.mxu0 %v1926
    %2673 = vmatprep.subr.bf16.mxu0 %v1921
    %2674 = vmatpush2.bf16.msra.mxu0 %v1920
    %2675 = vmatprep.subr.bf16.mxu0 %v1915
    %2676 = vmatpush2.bf16.msra.mxu0 %v1914
    %2677 = vmatprep.mubr.bf16.mxu0 %v388
    %2678 = vmatmul.mubr.bf16.gmra.mxu0 %v387
    %v2679 = vpop.f32.mrf.mxu0
    %v2680 = vadd.f32 %v2639, %v2679
    %v2681 = vpop.f32.mrf.mxu0
    %v2682 = vadd.f32 %v2641, %v2681
    %v2683 = vpop.f32.mrf.mxu0
    %v2684 = vpop.f32.mrf.mxu0
    %2685 = vdwg.mxu0
    %2686 = vmatprep.subr.bf16.mxu0 %v2005
    %2687 = vmatpush1.bf16.msra.mxu0 %v2004
    %2688 = vmatprep.subr.bf16.mxu0 %v1999
    %2689 = vmatpush1.bf16.msra.mxu0 %v1998
    %2690 = vmatprep.subr.bf16.mxu0 %v1993
    %2691 = vmatpush1.bf16.msra.mxu0 %v1992
    %2692 = vmatprep.subr.bf16.mxu0 %v1987
    %2693 = vmatpush1.bf16.msra.mxu0 %v1986
    %2694 = vmatprep.subr.bf16.mxu0 %v1981
    %2695 = vmatpush1.bf16.msra.mxu0 %v1980
    %2696 = vmatprep.subr.bf16.mxu0 %v1975
    %2697 = vmatpush1.bf16.msra.mxu0 %v1974
    %2698 = vmatprep.subr.bf16.mxu0 %v1969
    %2699 = vmatpush1.bf16.msra.mxu0 %v1968
    %2700 = vmatprep.subr.bf16.mxu0 %v1963
    %2701 = vmatpush1.bf16.msra.mxu0 %v1962
    %2702 = vmatprep.subr.bf16.mxu0 %v2053
    %2703 = vmatpush2.bf16.msra.mxu0 %v2052
    %2704 = vmatprep.subr.bf16.mxu0 %v2047
    %2705 = vmatpush2.bf16.msra.mxu0 %v2046
    %2706 = vmatprep.subr.bf16.mxu0 %v2041
    %2707 = vmatpush2.bf16.msra.mxu0 %v2040
    %2708 = vmatprep.subr.bf16.mxu0 %v2035
    %2709 = vmatpush2.bf16.msra.mxu0 %v2034
    %2710 = vmatprep.subr.bf16.mxu0 %v2029
    %2711 = vmatpush2.bf16.msra.mxu0 %v2028
    %2712 = vmatprep.subr.bf16.mxu0 %v2023
    %2713 = vmatpush2.bf16.msra.mxu0 %v2022
    %2714 = vmatprep.subr.bf16.mxu0 %v2017
    %2715 = vmatpush2.bf16.msra.mxu0 %v2016
    %2716 = vmatprep.subr.bf16.mxu0 %v2011
    %2717 = vmatpush2.bf16.msra.mxu0 %v2010
    %2718 = vmatprep.mubr.bf16.mxu0 %v390
    %2719 = vmatmul.mubr.bf16.gmra.mxu0 %v389
    %v2720 = vpop.f32.mrf.mxu0
    %v2721 = vadd.f32 %v2680, %v2720
    %v2722 = vpop.f32.mrf.mxu0
    %v2723 = vadd.f32 %v2682, %v2722
    %v2724 = vpop.f32.mrf.mxu0
    %v2725 = vpop.f32.mrf.mxu0
    %2726 = vdwg.mxu0
    %2727 = vmatprep.subr.bf16.mxu0 %v2101
    %2728 = vmatpush1.bf16.msra.mxu0 %v2100
    %2729 = vmatprep.subr.bf16.mxu0 %v2095
    %2730 = vmatpush1.bf16.msra.mxu0 %v2094
    %2731 = vmatprep.subr.bf16.mxu0 %v2089
    %2732 = vmatpush1.bf16.msra.mxu0 %v2088
    %2733 = vmatprep.subr.bf16.mxu0 %v2083
    %2734 = vmatpush1.bf16.msra.mxu0 %v2082
    %2735 = vmatprep.subr.bf16.mxu0 %v2077
    %2736 = vmatpush1.bf16.msra.mxu0 %v2076
    %2737 = vmatprep.subr.bf16.mxu0 %v2071
    %2738 = vmatpush1.bf16.msra.mxu0 %v2070
    %2739 = vmatprep.subr.bf16.mxu0 %v2065
    %2740 = vmatpush1.bf16.msra.mxu0 %v2064
    %2741 = vmatprep.subr.bf16.mxu0 %v2059
    %2742 = vmatpush1.bf16.msra.mxu0 %v2058
    %2743 = vmatprep.subr.bf16.mxu0 0
    %2744 = vmatpush2.bf16.msra.mxu0 0
    %2745 = vmatprep.subr.bf16.mxu0 0
    %2746 = vmatpush2.bf16.msra.mxu0 0
    %2747 = vmatprep.subr.bf16.mxu0 0
    %2748 = vmatpush2.bf16.msra.mxu0 0
    %2749 = vmatprep.subr.bf16.mxu0 0
    %2750 = vmatpush2.bf16.msra.mxu0 0
    %2751 = vmatprep.subr.bf16.mxu0 0
    %2752 = vmatpush2.bf16.msra.mxu0 0
    %2753 = vmatprep.subr.bf16.mxu0 0
    %2754 = vmatpush2.bf16.msra.mxu0 0
    %2755 = vmatprep.subr.bf16.mxu0 0
    %2756 = vmatpush2.bf16.msra.mxu0 0
    %2757 = vmatprep.subr.bf16.mxu0 0
    %2758 = vmatpush2.bf16.msra.mxu0 0
    %2759 = vmatprep.mubr.bf16.mxu0 0
    %2760 = vmatmul.mubr.bf16.gmra.mxu0 %v391
    %v2761 = vpop.f32.mrf.mxu0
    %v2762 = vadd.f32 %v2721, %v2761
    %v2763 = vpop.f32.mrf.mxu0
    %v2764 = vadd.f32 %v2723, %v2763
    %v2765 = vpop.f32.mrf.mxu0
    %v2766 = vpop.f32.mrf.mxu0
    %2767 = vdwg.mxu0
    %2768 = vmatprep.subr.bf16.mxu0 %v1815
    %2769 = vmatpush1.bf16.msra.mxu0 %v1814
    %2770 = vmatprep.subr.bf16.mxu0 %v1809
    %2771 = vmatpush1.bf16.msra.mxu0 %v1808
    %2772 = vmatprep.subr.bf16.mxu0 %v1803
    %2773 = vmatpush1.bf16.msra.mxu0 %v1802
    %2774 = vmatprep.subr.bf16.mxu0 %v1797
    %2775 = vmatpush1.bf16.msra.mxu0 %v1796
    %2776 = vmatprep.subr.bf16.mxu0 %v1791
    %2777 = vmatpush1.bf16.msra.mxu0 %v1790
    %2778 = vmatprep.subr.bf16.mxu0 %v1785
    %2779 = vmatpush1.bf16.msra.mxu0 %v1784
    %2780 = vmatprep.subr.bf16.mxu0 %v1779
    %2781 = vmatpush1.bf16.msra.mxu0 %v1778
    %2782 = vmatprep.subr.bf16.mxu0 %v1773
    %2783 = vmatpush1.bf16.msra.mxu0 %v1772
    %2784 = vmatprep.subr.bf16.mxu0 %v1863
    %2785 = vmatpush2.bf16.msra.mxu0 %v1862
    %2786 = vmatprep.subr.bf16.mxu0 %v1857
    %2787 = vmatpush2.bf16.msra.mxu0 %v1856
    %2788 = vmatprep.subr.bf16.mxu0 %v1851
    %2789 = vmatpush2.bf16.msra.mxu0 %v1850
    %2790 = vmatprep.subr.bf16.mxu0 %v1845
    %2791 = vmatpush2.bf16.msra.mxu0 %v1844
    %2792 = vmatprep.subr.bf16.mxu0 %v1839
    %2793 = vmatpush2.bf16.msra.mxu0 %v1838
    %2794 = vmatprep.subr.bf16.mxu0 %v1833
    %2795 = vmatpush2.bf16.msra.mxu0 %v1832
    %2796 = vmatprep.subr.bf16.mxu0 %v1827
    %2797 = vmatpush2.bf16.msra.mxu0 %v1826
    %2798 = vmatprep.subr.bf16.mxu0 %v1821
    %2799 = vmatpush2.bf16.msra.mxu0 %v1820
    %2800 = vmatprep.mubr.bf16.mxu0 %v386
    %2801 = vmatmul.mubr.bf16.gmra.mxu0 %v385
    %v2802 = vpop.f32.mrf.mxu0
    %v2803 = vadd.f32 %v749, %v2802
    %v2804 = vpop.f32.mrf.mxu0
    %v2805 = vadd.f32 %v753, %v2804
    %v2806 = vpop.f32.mrf.mxu0
    %v2807 = vpop.f32.mrf.mxu0
    %2808 = vdwg.mxu0
    %2809 = vmatprep.subr.bf16.mxu0 %v1911
    %2810 = vmatpush1.bf16.msra.mxu0 %v1910
    %2811 = vmatprep.subr.bf16.mxu0 %v1905
    %2812 = vmatpush1.bf16.msra.mxu0 %v1904
    %2813 = vmatprep.subr.bf16.mxu0 %v1899
    %2814 = vmatpush1.bf16.msra.mxu0 %v1898
    %2815 = vmatprep.subr.bf16.mxu0 %v1893
    %2816 = vmatpush1.bf16.msra.mxu0 %v1892
    %2817 = vmatprep.subr.bf16.mxu0 %v1887
    %2818 = vmatpush1.bf16.msra.mxu0 %v1886
    %2819 = vmatprep.subr.bf16.mxu0 %v1881
    %2820 = vmatpush1.bf16.msra.mxu0 %v1880
    %2821 = vmatprep.subr.bf16.mxu0 %v1875
    %2822 = vmatpush1.bf16.msra.mxu0 %v1874
    %2823 = vmatprep.subr.bf16.mxu0 %v1869
    %2824 = vmatpush1.bf16.msra.mxu0 %v1868
    %2825 = vmatprep.subr.bf16.mxu0 %v1959
    %2826 = vmatpush2.bf16.msra.mxu0 %v1958
    %2827 = vmatprep.subr.bf16.mxu0 %v1953
    %2828 = vmatpush2.bf16.msra.mxu0 %v1952
    %2829 = vmatprep.subr.bf16.mxu0 %v1947
    %2830 = vmatpush2.bf16.msra.mxu0 %v1946
    %2831 = vmatprep.subr.bf16.mxu0 %v1941
    %2832 = vmatpush2.bf16.msra.mxu0 %v1940
    %2833 = vmatprep.subr.bf16.mxu0 %v1935
    %2834 = vmatpush2.bf16.msra.mxu0 %v1934
    %2835 = vmatprep.subr.bf16.mxu0 %v1929
    %2836 = vmatpush2.bf16.msra.mxu0 %v1928
    %2837 = vmatprep.subr.bf16.mxu0 %v1923
    %2838 = vmatpush2.bf16.msra.mxu0 %v1922
    %2839 = vmatprep.subr.bf16.mxu0 %v1917
    %2840 = vmatpush2.bf16.msra.mxu0 %v1916
    %2841 = vmatprep.mubr.bf16.mxu0 %v388
    %2842 = vmatmul.mubr.bf16.gmra.mxu0 %v387
    %v2843 = vpop.f32.mrf.mxu0
    %v2844 = vadd.f32 %v2803, %v2843
    %v2845 = vpop.f32.mrf.mxu0
    %v2846 = vadd.f32 %v2805, %v2845
    %v2847 = vpop.f32.mrf.mxu0
    %v2848 = vpop.f32.mrf.mxu0
    %2849 = vdwg.mxu0
    %2850 = vmatprep.subr.bf16.mxu0 %v2007
    %2851 = vmatpush1.bf16.msra.mxu0 %v2006
    %2852 = vmatprep.subr.bf16.mxu0 %v2001
    %2853 = vmatpush1.bf16.msra.mxu0 %v2000
    %2854 = vmatprep.subr.bf16.mxu0 %v1995
    %2855 = vmatpush1.bf16.msra.mxu0 %v1994
    %2856 = vmatprep.subr.bf16.mxu0 %v1989
    %2857 = vmatpush1.bf16.msra.mxu0 %v1988
    %2858 = vmatprep.subr.bf16.mxu0 %v1983
    %2859 = vmatpush1.bf16.msra.mxu0 %v1982
    %2860 = vmatprep.subr.bf16.mxu0 %v1977
    %2861 = vmatpush1.bf16.msra.mxu0 %v1976
    %2862 = vmatprep.subr.bf16.mxu0 %v1971
    %2863 = vmatpush1.bf16.msra.mxu0 %v1970
    %2864 = vmatprep.subr.bf16.mxu0 %v1965
    %2865 = vmatpush1.bf16.msra.mxu0 %v1964
    %2866 = vmatprep.subr.bf16.mxu0 %v2055
    %2867 = vmatpush2.bf16.msra.mxu0 %v2054
    %2868 = vmatprep.subr.bf16.mxu0 %v2049
    %2869 = vmatpush2.bf16.msra.mxu0 %v2048
    %2870 = vmatprep.subr.bf16.mxu0 %v2043
    %2871 = vmatpush2.bf16.msra.mxu0 %v2042
    %2872 = vmatprep.subr.bf16.mxu0 %v2037
    %2873 = vmatpush2.bf16.msra.mxu0 %v2036
    %2874 = vmatprep.subr.bf16.mxu0 %v2031
    %2875 = vmatpush2.bf16.msra.mxu0 %v2030
    %2876 = vmatprep.subr.bf16.mxu0 %v2025
    %2877 = vmatpush2.bf16.msra.mxu0 %v2024
    %2878 = vmatprep.subr.bf16.mxu0 %v2019
    %2879 = vmatpush2.bf16.msra.mxu0 %v2018
    %2880 = vmatprep.subr.bf16.mxu0 %v2013
    %2881 = vmatpush2.bf16.msra.mxu0 %v2012
    %2882 = vmatprep.mubr.bf16.mxu0 %v390
    %2883 = vmatmul.mubr.bf16.gmra.mxu0 %v389
    %v2884 = vpop.f32.mrf.mxu0
    %v2885 = vadd.f32 %v2844, %v2884
    %v2886 = vpop.f32.mrf.mxu0
    %v2887 = vadd.f32 %v2846, %v2886
    %v2888 = vpop.f32.mrf.mxu0
    %v2889 = vpop.f32.mrf.mxu0
    %2890 = vdwg.mxu0
    %2891 = vmatprep.subr.bf16.mxu0 %v2103
    %2892 = vmatpush1.bf16.msra.mxu0 %v2102
    %2893 = vmatprep.subr.bf16.mxu0 %v2097
    %2894 = vmatpush1.bf16.msra.mxu0 %v2096
    %2895 = vmatprep.subr.bf16.mxu0 %v2091
    %2896 = vmatpush1.bf16.msra.mxu0 %v2090
    %2897 = vmatprep.subr.bf16.mxu0 %v2085
    %2898 = vmatpush1.bf16.msra.mxu0 %v2084
    %2899 = vmatprep.subr.bf16.mxu0 %v2079
    %2900 = vmatpush1.bf16.msra.mxu0 %v2078
    %2901 = vmatprep.subr.bf16.mxu0 %v2073
    %2902 = vmatpush1.bf16.msra.mxu0 %v2072
    %2903 = vmatprep.subr.bf16.mxu0 %v2067
    %2904 = vmatpush1.bf16.msra.mxu0 %v2066
    %2905 = vmatprep.subr.bf16.mxu0 %v2061
    %2906 = vmatpush1.bf16.msra.mxu0 %v2060
    %2907 = vmatprep.subr.bf16.mxu0 0
    %2908 = vmatpush2.bf16.msra.mxu0 0
    %2909 = vmatprep.subr.bf16.mxu0 0
    %2910 = vmatpush2.bf16.msra.mxu0 0
    %2911 = vmatprep.subr.bf16.mxu0 0
    %2912 = vmatpush2.bf16.msra.mxu0 0
    %2913 = vmatprep.subr.bf16.mxu0 0
    %2914 = vmatpush2.bf16.msra.mxu0 0
    %2915 = vmatprep.subr.bf16.mxu0 0
    %2916 = vmatpush2.bf16.msra.mxu0 0
    %2917 = vmatprep.subr.bf16.mxu0 0
    %2918 = vmatpush2.bf16.msra.mxu0 0
    %2919 = vmatprep.subr.bf16.mxu0 0
    %2920 = vmatpush2.bf16.msra.mxu0 0
    %2921 = vmatprep.subr.bf16.mxu0 0
    %2922 = vmatpush2.bf16.msra.mxu0 0
    %2923 = vmatprep.mubr.bf16.mxu0 0
    %2924 = vmatmul.mubr.bf16.gmra.mxu0 %v391
    %v2925 = vpop.f32.mrf.mxu0
    %v2926 = vadd.f32 %v2885, %v2925
    %v2927 = vpop.f32.mrf.mxu0
    %v2928 = vadd.f32 %v2887, %v2927
    %v2929 = vpop.f32.mrf.mxu0
    %v2930 = vpop.f32.mrf.mxu0
    %2931 = vdwg.mxu0
    %2932 = vst [vmem:[#allocation11] sm:$0xff] %v2598
    %2933 = vst [vmem:[#allocation11 + $0x8] sm:$0xff] %v2600
    %2934 = vst [vmem:[#allocation11 + $0x10] sm:$0xff] %v2762
    %2935 = vst [vmem:[#allocation11 + $0x18] sm:$0xff] %v2764
    %2936 = vst [vmem:[#allocation11 + $0x20] sm:$0xff] %v2926
    %2937 = vst [vmem:[#allocation11 + $0x28] sm:$0xff] %v2928
    // Predicated region
    $region42: #{tpu_custom_call.1} parent=1 // pred_check
      _
    $region43: #{tpu_custom_call.1} parent=1 // pred_check_branch
      %2939 = sbr.rel (0) target = $region45
    $region44: #{tpu_custom_call.1} parent=1 // pred_region
      %s2941 = ssub.s32 768, 768
      %2942 = vsyncadd [#allocation4], %s2941
      %s2944 = sshll.u32 [#allocation11], 4
      %s2945 = int_to_ptr.vmem [resolvable:$true] %s2944
      %2947 = dma.vmem_to_hbm [thread:$0]  %s2945, 768, %s5, [#allocation4]
    $region45: #{tpu_custom_call.1} parent=1 // pred_fallthru
      _
    // Predicated region
    $region46: #{tpu_custom_call.1} parent=1 // pred_check
      _
    $region47: #{tpu_custom_call.1} parent=1 // pred_check_branch
      %2949 = sbr.rel (0) target = $region49
    $region48: #{tpu_custom_call.1} parent=1 // pred_region
      %2950 = dma.done [#allocation4], 768
    $region49: #{tpu_custom_call.1} parent=1 // pred_fallthru
      _
    %2951 = vsyncpa [#allocation3], 1
    %2952 = vsyncpa [#allocation6], 1
    %2953 = vsyncpa [#allocation9], 1
    %2954 = vsyncpa [#allocation4], 1

</llo_original>
